<compile_context>
chip_gen: v7x
topology: tpu7x:2x2x1
jax: 0.10.0
libtpu: 0.0.40
codegen_flags: <defaults>
</compile_context>

<pallas_src>
import math

import jax
import jax.numpy as jnp
from jax.experimental import pallas as pl
from jax.experimental.pallas import tpu as pltpu


def _softplus(x):
    # matches torch.nn.functional.softplus (threshold=20), numerically stable
    return jnp.where(x > 20.0, x, jnp.log1p(jnp.exp(jnp.minimum(x, 20.0))))


def _round_up(x, m):
    return (x + m - 1) // m * m


def _fold_factor(dz, du, cap=32):
    # smallest k such that k*dz and k*du are multiples of 128 (lane-dense IO), capped.
    kz = 128 // math.gcd(128, dz)
    ku = 128 // math.gcd(128, du)
    k = kz * ku // math.gcd(kz, ku)
    if k > cap:
        k = kz if kz <= cap else 1
    return k


def _num_tensorcores():
    # v7x chips have 2 TensorCores per chip; v5e/v6e have 1.
    try:
        kind = jax.devices()[0].device_kind.lower()
        return 2 if "v7" in kind else 1
    except Exception:
        return 1


def transition_kernel(z_ref, u_ref,
                      w1z_ref, w1u_ref, b1_ref,
                      w2_ref, b2_ref,
                      wsz_ref, wsu_ref, bs_ref,
                      mu_ref, sig_ref):
    # z/u are lane-folded: (tmf, k*Dz) / (tmf, k*Du), native IO dtype straight to the MXU.
    z = z_ref[...]
    u = u_ref[...]

    # ---- t_mu: IEF-style residual MLP transition (stand-in for AttentionIEFTransition) ----
    h = jnp.maximum(
        jnp.dot(z, w1z_ref[...], preferred_element_type=jnp.float32)
        + jnp.dot(u, w1u_ref[...], preferred_element_type=jnp.float32)
        + b1_ref[...], 0.0).astype(w2_ref.dtype)
    mu = (jnp.dot(h, w2_ref[...], preferred_element_type=jnp.float32)
          + b2_ref[...]
          + z.astype(jnp.float32))

    # ---- t_sigma: softplus(nn.Linear(dim_stochastic + dim_treat, dim_stochastic)) --------
    sig = _softplus(
        jnp.dot(z, wsz_ref[...], preferred_element_type=jnp.float32)
        + jnp.dot(u, wsu_ref[...], preferred_element_type=jnp.float32)
        + bs_ref[...])

    mu_ref[...] = mu.astype(mu_ref.dtype)
    sig_ref[...] = sig.astype(sig_ref.dtype)


def prepare_params(params, *, io_dtype=None, fold_cap=32):
    """Build the lane-folded (block-diagonal) weights ONCE, outside the forward call.

    Returns a dict of fused arrays plus the fold factor 'k'.  All weights/biases are
    cast to the IO dtype (uniform mixed-precision policy).
    """
    dz = params["w1z"].shape[0]
    du = params["w1u"].shape[0]
    k = _fold_factor(dz, du, cap=fold_cap)
    if io_dtype is None:
        io_dtype = params["w1z"].dtype
    eye = jnp.eye(k, dtype=jnp.float32)
    bd = lambda w: jnp.kron(eye, w).astype(io_dtype)        # block-diagonal replicate
    tile = lambda b: jnp.tile(b, (1, k)).astype(io_dtype)    # bias repeated per chunk
    return {
        "k": k,
        "w1z": bd(params["w1z"]), "w1u": bd(params["w1u"]), "b1": tile(params["b1"]),
        "w2": bd(params["w2"]),   "b2": tile(params["b2"]),
        "wsz": bd(params["wsz"]), "wsu": bd(params["wsu"]), "bs": tile(params["bs"]),
    }


def transition_forward(z, u, fused, *, eps=0.0, tm=8192):
    """z: (B, T, Dz), u: (B, T, Du) -> (mu, sig) each (B, T, Dz).

    `fused` comes from prepare_params().  `tm` is the row tile in ORIGINAL rows
    (sweep 2048-8192); the folded tile is tm // k, VMEM-budgeted and sublane-aligned.
    """
    del eps  # TODO(synk): unused by the stand-in mu head (see module-level comment)
    B, T, Dz = z.shape
    Du = u.shape[-1]
    k = fused["k"]
    N = B * T

    # --- lane-dense row fold: k consecutive rows share one lane slab --------------------
    Np = _round_up(N, k)
    zf = z.reshape(N, Dz)
    uf = u.reshape(N, Du)
    if Np != N:  # zero-pad so no folded slab mixes valid and undefined rows
        zf = jnp.pad(zf, ((0, Np - N), (0, 0)))
        uf = jnp.pad(uf, ((0, Np - N), (0, 0)))
    Nf = Np // k
    z_fold = zf.reshape(Nf, k * Dz)
    u_fold = uf.reshape(Nf, k * Du)

    # --- folded-row tile size ------------------------------------------------------------
    itemsz = jnp.dtype(z.dtype).itemsize
    sub = 32 // itemsz                       # sublane packing: f32->8, bf16->16
    lane_pad = lambda d: _round_up(d, 128)   # VMEM lane padding of an un-dense last dim
    row_bytes = (3 * lane_pad(k * Dz) + lane_pad(k * Du)) * itemsz   # z + mu + sig + u
    vmem_budget = 8 << 20                    # double-buffered IO tile budget (~8 MiB)
    tmf_cap = max(sub, (vmem_budget // 2) // max(row_bytes, 1))
    tmf = _round_up(min(max(1, tm // k), tmf_cap), sub)

    n_cores = _num_tensorcores()
    if n_cores > 1 and pl.cdiv(Nf, tmf) < n_cores and Nf >= n_cores * sub:
        # v7x only: keep both TensorCores busy (even number of parallel steps)
        tmf = _round_up(pl.cdiv(Nf, n_cores), sub)
    if tmf >= Nf:
        tmf = Nf                             # single full-extent block is always legal
    grid = (pl.cdiv(Nf, tmf),)

    row_spec = lambda d: pl.BlockSpec((tmf, d), lambda i: (i, 0))
    full_spec = lambda a: pl.BlockSpec(a.shape, lambda i: (0,) * a.ndim)

    mu, sig = pl.pallas_call(
        transition_kernel,
        out_shape=(jax.ShapeDtypeStruct((Nf, k * Dz), z.dtype),
                   jax.ShapeDtypeStruct((Nf, k * Dz), z.dtype)),
        grid_spec=pltpu.PrefetchScalarGridSpec(
            num_scalar_prefetch=0,
            grid=grid,
            in_specs=[row_spec(k * Dz), row_spec(k * Du),
                      full_spec(fused["w1z"]), full_spec(fused["w1u"]), full_spec(fused["b1"]),
                      full_spec(fused["w2"]), full_spec(fused["b2"]),
                      full_spec(fused["wsz"]), full_spec(fused["wsu"]), full_spec(fused["bs"])],
            out_specs=[row_spec(k * Dz), row_spec(k * Dz)],
        ),
        compiler_params=pltpu.CompilerParams(
            dimension_semantics=("parallel",)),
    )(z_fold, u_fold,
      fused["w1z"], fused["w1u"], fused["b1"],
      fused["w2"], fused["b2"],
      fused["wsz"], fused["wsu"], fused["bs"])

    mu = mu.reshape(Np, Dz)[:N].reshape(B, T, Dz)
    sig = sig.reshape(Np, Dz)[:N].reshape(B, T, Dz)
    return mu, sig


def init_params(key, dim_stochastic, dim_treat, dim_hidden):
    Dz, Du, H = dim_stochastic, dim_treat, dim_hidden
    ks = jax.random.split(key, 8)

    def lin(k, fan_in, shape):
        bound = 1.0 / jnp.sqrt(fan_in)
        return jax.random.uniform(k, shape, jnp.float32, -bound, bound)

    fan1 = Dz + Du
    return {
        # t_mu (IEF-style MLP): Linear(Dz+Du -> H), Linear(H -> Dz)
        "w1z": lin(ks[0], fan1, (Dz, H)),
        "w1u": lin(ks[1], fan1, (Du, H)),
        "b1":  lin(ks[2], fan1, (1, H)),
        "w2":  lin(ks[3], H, (H, Dz)),
        "b2":  lin(ks[4], H, (1, Dz)),
        # t_sigma: Linear(Dz+Du -> Dz)
        "wsz": lin(ks[5], fan1, (Dz, Dz)),
        "wsu": lin(ks[6], fan1, (Du, Dz)),
        "bs":  lin(ks[7], fan1, (1, Dz)),
    }


if __name__ == "__main__":
    key = jax.random.PRNGKey(0)
    k_p, k_z, k_u = jax.random.split(key, 3)

    B, T = 2, 8
    dim_stochastic, dim_treat, dim_hidden = 16, 8, 32

    params = init_params(k_p, dim_stochastic, dim_treat, dim_hidden)
    fused = prepare_params(params)   # lane-folded block-diagonal weights, built once

    z = jax.random.normal(k_z, (B, T, dim_stochastic), jnp.float32)
    u = jax.random.normal(k_u, (B, T, dim_treat), jnp.float32)

    mu, sig = transition_forward(z, u, fused)
    jax.block_until_ready((mu, sig))

    # quick sanity check against a pure-JAX reference of the same math
    zu = jnp.concatenate([z, u], -1)
    w1 = jnp.concatenate([params["w1z"], params["w1u"]], 0)
    ws = jnp.concatenate([params["wsz"], params["wsu"]], 0)
    h_ref = jnp.maximum(zu @ w1 + params["b1"], 0.0)
    mu_ref = h_ref @ params["w2"] + params["b2"] + z
    sig_ref = jax.nn.softplus(zu @ ws + params["bs"])
    assert jnp.allclose(mu, mu_ref, atol=1e-4, rtol=1e-4)
    assert jnp.allclose(sig, sig_ref, atol=1e-4, rtol=1e-4)

    print("KERNEL_OK")
</pallas_src>

<mosaic_0001>
module attributes {stable_mosaic.version = 11 : i64} {
  func.func @transition_kernel(%arg0: i32, %arg1: memref<1x256xf32, #tpu.memory_space<vmem>>, %arg2: memref<1x128xf32, #tpu.memory_space<vmem>>, %arg3: memref<256x512xf32, #tpu.memory_space<vmem>>, %arg4: memref<128x512xf32, #tpu.memory_space<vmem>>, %arg5: memref<1x512xf32, #tpu.memory_space<vmem>>, %arg6: memref<512x256xf32, #tpu.memory_space<vmem>>, %arg7: memref<1x256xf32, #tpu.memory_space<vmem>>, %arg8: memref<256x256xf32, #tpu.memory_space<vmem>>, %arg9: memref<128x256xf32, #tpu.memory_space<vmem>>, %arg10: memref<1x256xf32, #tpu.memory_space<vmem>>, %arg11: memref<1x256xf32, #tpu.memory_space<vmem>>, %arg12: memref<1x256xf32, #tpu.memory_space<vmem>>) attributes {dimension_semantics = [#tpu.dimension_semantics<parallel>], iteration_bounds = array<i64: 1>, scalar_prefetch = 0 : i64, scratch_operands = 0 : i64, tpu.core_type = #tpu.core_type<tc>, window_params = [{transform_indices = @transform_0, window_bounds = array<i64: 1, 256>}, {transform_indices = @transform_1, window_bounds = array<i64: 1, 128>}, {pipeline_mode = #tpu.pipeline_mode<synchronous>, transform_indices = @transform_2, window_bounds = array<i64: 256, 512>}, {pipeline_mode = #tpu.pipeline_mode<synchronous>, transform_indices = @transform_3, window_bounds = array<i64: 128, 512>}, {pipeline_mode = #tpu.pipeline_mode<synchronous>, transform_indices = @transform_4, window_bounds = array<i64: 1, 512>}, {pipeline_mode = #tpu.pipeline_mode<synchronous>, transform_indices = @transform_5, window_bounds = array<i64: 512, 256>}, {pipeline_mode = #tpu.pipeline_mode<synchronous>, transform_indices = @transform_6, window_bounds = array<i64: 1, 256>}, {pipeline_mode = #tpu.pipeline_mode<synchronous>, transform_indices = @transform_7, window_bounds = array<i64: 256, 256>}, {pipeline_mode = #tpu.pipeline_mode<synchronous>, transform_indices = @transform_8, window_bounds = array<i64: 128, 256>}, {pipeline_mode = #tpu.pipeline_mode<synchronous>, transform_indices = @transform_9, window_bounds = array<i64: 1, 256>}, {transform_indices = @transform_10, window_bounds = array<i64: 1, 256>}, {transform_indices = @transform_11, window_bounds = array<i64: 1, 256>}]} {
    %c0 = arith.constant 0 : index
    %c0_0 = arith.constant 0 : index
    %0 = vector.load %arg1[%c0, %c0_0] : memref<1x256xf32, #tpu.memory_space<vmem>>, vector<1x256xf32>
    %c0_1 = arith.constant 0 : index
    %c0_2 = arith.constant 0 : index
    %1 = vector.load %arg2[%c0_1, %c0_2] : memref<1x128xf32, #tpu.memory_space<vmem>>, vector<1x128xf32>
    %c0_3 = arith.constant 0 : index
    %c0_4 = arith.constant 0 : index
    %2 = vector.load %arg3[%c0_3, %c0_4] : memref<256x512xf32, #tpu.memory_space<vmem>>, vector<256x512xf32>
    %cst = arith.constant dense<0.000000e+00> : vector<1x512xf32>
    %3 = tpu.matmul %0, %2, %cst {dimension_numbers = #tpu.dot_dimension_numbers<[1], [0], [0], [1], [0, 0, 1, 1], [], []>} : vector<1x256xf32>, vector<256x512xf32>, vector<1x512xf32> -> vector<1x512xf32>
    %c0_5 = arith.constant 0 : index
    %c0_6 = arith.constant 0 : index
    %4 = vector.load %arg4[%c0_5, %c0_6] : memref<128x512xf32, #tpu.memory_space<vmem>>, vector<128x512xf32>
    %cst_7 = arith.constant dense<0.000000e+00> : vector<1x512xf32>
    %5 = tpu.matmul %1, %4, %cst_7 {dimension_numbers = #tpu.dot_dimension_numbers<[1], [0], [0], [1], [0, 0, 1, 1], [], []>} : vector<1x128xf32>, vector<128x512xf32>, vector<1x512xf32> -> vector<1x512xf32>
    %6 = arith.addf %3, %5 : vector<1x512xf32>
    %c0_8 = arith.constant 0 : index
    %c0_9 = arith.constant 0 : index
    %7 = vector.load %arg5[%c0_8, %c0_9] : memref<1x512xf32, #tpu.memory_space<vmem>>, vector<1x512xf32>
    %8 = arith.addf %6, %7 : vector<1x512xf32>
    %cst_10 = arith.constant 0.000000e+00 : f32
    %9 = vector.broadcast %cst_10 : f32 to vector<1x512xf32>
    %10 = arith.maximumf %8, %9 : vector<1x512xf32>
    %c0_11 = arith.constant 0 : index
    %c0_12 = arith.constant 0 : index
    %11 = vector.load %arg6[%c0_11, %c0_12] : memref<512x256xf32, #tpu.memory_space<vmem>>, vector<512x256xf32>
    %cst_13 = arith.constant dense<0.000000e+00> : vector<1x256xf32>
    %12 = tpu.matmul %10, %11, %cst_13 {dimension_numbers = #tpu.dot_dimension_numbers<[1], [0], [0], [1], [0, 0, 1, 1], [], []>} : vector<1x512xf32>, vector<512x256xf32>, vector<1x256xf32> -> vector<1x256xf32>
    %c0_14 = arith.constant 0 : index
    %c0_15 = arith.constant 0 : index
    %13 = vector.load %arg7[%c0_14, %c0_15] : memref<1x256xf32, #tpu.memory_space<vmem>>, vector<1x256xf32>
    %14 = arith.addf %12, %13 : vector<1x256xf32>
    %15 = arith.addf %14, %0 : vector<1x256xf32>
    %c0_16 = arith.constant 0 : index
    %c0_17 = arith.constant 0 : index
    %16 = vector.load %arg8[%c0_16, %c0_17] : memref<256x256xf32, #tpu.memory_space<vmem>>, vector<256x256xf32>
    %cst_18 = arith.constant dense<0.000000e+00> : vector<1x256xf32>
    %17 = tpu.matmul %0, %16, %cst_18 {dimension_numbers = #tpu.dot_dimension_numbers<[1], [0], [0], [1], [0, 0, 1, 1], [], []>} : vector<1x256xf32>, vector<256x256xf32>, vector<1x256xf32> -> vector<1x256xf32>
    %c0_19 = arith.constant 0 : index
    %c0_20 = arith.constant 0 : index
    %18 = vector.load %arg9[%c0_19, %c0_20] : memref<128x256xf32, #tpu.memory_space<vmem>>, vector<128x256xf32>
    %cst_21 = arith.constant dense<0.000000e+00> : vector<1x256xf32>
    %19 = tpu.matmul %1, %18, %cst_21 {dimension_numbers = #tpu.dot_dimension_numbers<[1], [0], [0], [1], [0, 0, 1, 1], [], []>} : vector<1x128xf32>, vector<128x256xf32>, vector<1x256xf32> -> vector<1x256xf32>
    %20 = arith.addf %17, %19 : vector<1x256xf32>
    %c0_22 = arith.constant 0 : index
    %c0_23 = arith.constant 0 : index
    %21 = vector.load %arg10[%c0_22, %c0_23] : memref<1x256xf32, #tpu.memory_space<vmem>>, vector<1x256xf32>
    %22 = arith.addf %20, %21 : vector<1x256xf32>
    %cst_24 = arith.constant 2.000000e+01 : f32
    %23 = vector.broadcast %cst_24 : f32 to vector<1x256xf32>
    %24 = arith.cmpf ogt, %22, %23 : vector<1x256xf32>
    %cst_25 = arith.constant 2.000000e+01 : f32
    %25 = vector.broadcast %cst_25 : f32 to vector<1x256xf32>
    %26 = arith.minimumf %22, %25 : vector<1x256xf32>
    %27 = math.exp %26 : vector<1x256xf32>
    %28 = math.log1p %27 : vector<1x256xf32>
    %29 = arith.select %24, %22, %28 : vector<1x256xi1>, vector<1x256xf32>
    %c0_26 = arith.constant 0 : index
    %c0_27 = arith.constant 0 : index
    %30 = vector.load %arg11[%c0_26, %c0_27] : memref<1x256xf32, #tpu.memory_space<vmem>>, vector<1x256xf32>
    tpu.vector_store %arg11[%c0_26, %c0_27], %15 {strides = array<i32>} : memref<1x256xf32, #tpu.memory_space<vmem>>, vector<1x256xf32>,
    %c0_28 = arith.constant 0 : index
    %c0_29 = arith.constant 0 : index
    %31 = vector.load %arg12[%c0_28, %c0_29] : memref<1x256xf32, #tpu.memory_space<vmem>>, vector<1x256xf32>
    tpu.vector_store %arg12[%c0_28, %c0_29], %29 {strides = array<i32>} : memref<1x256xf32, #tpu.memory_space<vmem>>, vector<1x256xf32>,
    return
  }
  func.func @transform_0(%arg0: i32) -> (i32, i32) {
    %c0_i32 = arith.constant 0 : i32
    %c0_i32_0 = arith.constant 0 : i32
    return %arg0, %c0_i32 : i32, i32
  }
  func.func @transform_1(%arg0: i32) -> (i32, i32) {
    %c0_i32 = arith.constant 0 : i32
    %c0_i32_0 = arith.constant 0 : i32
    return %arg0, %c0_i32 : i32, i32
  }
  func.func @transform_2(%arg0: i32) -> (i32, i32) {
    %c0_i32 = arith.constant 0 : i32
    %c0_i32_0 = arith.constant 0 : i32
    %c0_i32_1 = arith.constant 0 : i32
    return %c0_i32, %c0_i32_0 : i32, i32
  }
  func.func @transform_3(%arg0: i32) -> (i32, i32) {
    %c0_i32 = arith.constant 0 : i32
    %c0_i32_0 = arith.constant 0 : i32
    %c0_i32_1 = arith.constant 0 : i32
    return %c0_i32, %c0_i32_0 : i32, i32
  }
  func.func @transform_4(%arg0: i32) -> (i32, i32) {
    %c0_i32 = arith.constant 0 : i32
    %c0_i32_0 = arith.constant 0 : i32
    %c0_i32_1 = arith.constant 0 : i32
    return %c0_i32, %c0_i32_0 : i32, i32
  }
  func.func @transform_5(%arg0: i32) -> (i32, i32) {
    %c0_i32 = arith.constant 0 : i32
    %c0_i32_0 = arith.constant 0 : i32
    %c0_i32_1 = arith.constant 0 : i32
    return %c0_i32, %c0_i32_0 : i32, i32
  }
  func.func @transform_6(%arg0: i32) -> (i32, i32) {
    %c0_i32 = arith.constant 0 : i32
    %c0_i32_0 = arith.constant 0 : i32
    %c0_i32_1 = arith.constant 0 : i32
    return %c0_i32, %c0_i32_0 : i32, i32
  }
  func.func @transform_7(%arg0: i32) -> (i32, i32) {
    %c0_i32 = arith.constant 0 : i32
    %c0_i32_0 = arith.constant 0 : i32
    %c0_i32_1 = arith.constant 0 : i32
    return %c0_i32, %c0_i32_0 : i32, i32
  }
  func.func @transform_8(%arg0: i32) -> (i32, i32) {
    %c0_i32 = arith.constant 0 : i32
    %c0_i32_0 = arith.constant 0 : i32
    %c0_i32_1 = arith.constant 0 : i32
    return %c0_i32, %c0_i32_0 : i32, i32
  }
  func.func @transform_9(%arg0: i32) -> (i32, i32) {
    %c0_i32 = arith.constant 0 : i32
    %c0_i32_0 = arith.constant 0 : i32
    %c0_i32_1 = arith.constant 0 : i32
    return %c0_i32, %c0_i32_0 : i32, i32
  }
  func.func @transform_10(%arg0: i32) -> (i32, i32) {
    %c0_i32 = arith.constant 0 : i32
    %c0_i32_0 = arith.constant 0 : i32
    return %arg0, %c0_i32 : i32, i32
  }
  func.func @transform_11(%arg0: i32) -> (i32, i32) {
    %c0_i32 = arith.constant 0 : i32
    %c0_i32_0 = arith.constant 0 : i32
    return %arg0, %c0_i32 : i32, i32
  }
}

</mosaic_0001>

<llo_original>
// kernel: tpu_custom_call.1
$region0: #{tpu_custom_call.1}
  #allocation0 [shape = 'u32[]', space=smem, size = 0x4, offset = 0x4, fixed_abs, tag = 'smem constant byte address 0x4 - core index']
  #allocation1 [shape = 'u32[144,128]{1,0:T(1,128)}', space=vmem, size = 0x12000, scoped, tag = 'internal scratch']
  %s0 = inlined_call_operand.hbm [shape: f32[1,256], index: 0, kind: input, shape index: {}]
  %s1 = inlined_call_operand.vmem [shape: f32[1,128], index: 1, kind: input, shape index: {}]
  %s2 = inlined_call_operand.hbm [shape: f32[256,512], index: 2, kind: input, shape index: {}]
  %s3 = inlined_call_operand.hbm [shape: f32[128,512], index: 3, kind: input, shape index: {}]
  %s4 = inlined_call_operand.vmem [shape: f32[1,512], index: 4, kind: input, shape index: {}]
  %s5 = inlined_call_operand.hbm [shape: f32[512,256], index: 5, kind: input, shape index: {}]
  %s6 = inlined_call_operand.vmem [shape: f32[1,256], index: 6, kind: input, shape index: {}]
  %s7 = inlined_call_operand.hbm [shape: f32[256,256], index: 7, kind: input, shape index: {}]
  %s8 = inlined_call_operand.hbm [shape: f32[128,256], index: 8, kind: input, shape index: {}]
  %s9 = inlined_call_operand.vmem [shape: f32[1,256], index: 9, kind: input, shape index: {}]
  %s10 = inlined_call_operand.hbm [shape: f32[1,256], index: 10, kind: output, shape index: {0}]
  %s11 = inlined_call_operand.hbm [shape: f32[1,256], index: 11, kind: output, shape index: {1}]
  %12 = xla_tuple %s10, %s11
  %s13 = sld [smem:[#allocation0]]
  $region82: #{tpu_custom_call.1} parent=0
    _
  %s15 = ssub.s32 1, %s13
  %s16 = scalar_select 0, %s15, %s13
  $region1: #{tpu_custom_call.1} parent=0
    #allocation2 [shape = 'u8[1024]{0}', space=vmem, size = 0x400, scoped, tag = 'input window, operand 0, single buffered']
    #allocation3 [shape = 's32[1]{0}', space=sflag, size = 0x4, scoped, tag = 'scoped memory for tpu_custom_call.1']
    #allocation4 [shape = 's32[1]{0}', space=sflag, size = 0x4, scoped, tag = 'scoped memory for tpu_custom_call.1']
    #allocation5 [shape = 'u8[524288]{0}', space=vmem, size = 0x80000, scoped, tag = 'input window, operand 2, single buffered']
    #allocation6 [shape = 's32[1]{0}', space=sflag, size = 0x4, scoped, tag = 'scoped memory for tpu_custom_call.1']
    #allocation7 [shape = 'u8[262144]{0}', space=vmem, size = 0x40000, scoped, tag = 'input window, operand 3, single buffered']
    #allocation8 [shape = 'u8[524288]{0}', space=vmem, size = 0x80000, scoped, tag = 'input window, operand 5, single buffered']
    #allocation9 [shape = 's32[1]{0}', space=sflag, size = 0x4, scoped, tag = 'scoped memory for tpu_custom_call.1']
    #allocation10 [shape = 'u8[262144]{0}', space=vmem, size = 0x40000, scoped, tag = 'input window, operand 7, single buffered']
    #allocation11 [shape = 'u8[131072]{0}', space=vmem, size = 0x20000, scoped, tag = 'input window, operand 8, single buffered']
    #allocation12 [shape = 's32[1]{0}', space=sflag, size = 0x4, scoped, tag = 'scoped memory for tpu_custom_call.1']
    #allocation13 [shape = 'u8[1024]{0}', space=vmem, size = 0x400, scoped, tag = 'output window, operand 0, single buffered']
    #allocation14 [shape = 'u8[1024]{0}', space=vmem, size = 0x400, scoped, tag = 'output window, operand 1, single buffered']
    #allocation15 [shape = 's32[1]{0}', space=sflag, size = 0x4, scoped, tag = 'scoped memory for tpu_custom_call.1']
    %17 = vsyncpa [#allocation3], 0
    %18 = vsyncpa [#allocation6], 0
    %19 = vsyncpa [#allocation9], 0
    %20 = vsyncpa [#allocation12], 0
    %21 = vsyncpa [#allocation4], 0
    %22 = vsyncpa [#allocation15], 0
    // Predicated region
    $region2: #{tpu_custom_call.1} parent=1 // pred_check
      _
    $region3: #{tpu_custom_call.1} parent=1 // pred_check_branch
      %24 = sbr.rel (0) target = $region5
    $region4: #{tpu_custom_call.1} parent=1 // pred_region
      %s26 = ssub.s32 32, 32
      %27 = vsyncadd [#allocation3], %s26
      %s29 = sshll.u32 [#allocation2], 4
      %s30 = int_to_ptr.vmem [resolvable:$true] %s29
      %32 = dma.hbm_to_vmem [thread:$0]  %s0, 32, %s30, [#allocation3]
    $region5: #{tpu_custom_call.1} parent=1 // pred_fallthru
      _
    // Predicated region
    $region6: #{tpu_custom_call.1} parent=1 // pred_check
      _
    $region7: #{tpu_custom_call.1} parent=1 // pred_check_branch
      %34 = sbr.rel (0) target = $region9
    $region8: #{tpu_custom_call.1} parent=1 // pred_region
      _
    $region9: #{tpu_custom_call.1} parent=1 // pred_fallthru
      _
    // Predicated region
    $region10: #{tpu_custom_call.1} parent=1 // pred_check
      _
    $region11: #{tpu_custom_call.1} parent=1 // pred_check_branch
      %36 = sbr.rel (0) target = $region13
    $region12: #{tpu_custom_call.1} parent=1 // pred_region
      %s38 = ssub.s32 16384, 16384
      %39 = vsyncadd [#allocation6], %s38
      %s40 = sshll.u32 [#allocation5], 4
      %s41 = int_to_ptr.vmem [resolvable:$true] %s40
      %46 = dma.hbm_to_vmem [thread:$0]  %s2, 16384, %s41, [#allocation6], 512, 512, 32
    $region13: #{tpu_custom_call.1} parent=1 // pred_fallthru
      _
    // Predicated region
    $region14: #{tpu_custom_call.1} parent=1 // pred_check
      _
    $region15: #{tpu_custom_call.1} parent=1 // pred_check_branch
      %48 = sbr.rel (0) target = $region17
    $region16: #{tpu_custom_call.1} parent=1 // pred_region
      %s50 = ssub.s32 8192, 8192
      %51 = vsyncadd [#allocation6], %s50
      %s52 = sshll.u32 [#allocation7], 4
      %s53 = int_to_ptr.vmem [resolvable:$true] %s52
      %58 = dma.hbm_to_vmem [thread:$0]  %s3, 8192, %s53, [#allocation6], 512, 512, 32
    $region17: #{tpu_custom_call.1} parent=1 // pred_fallthru
      _
    // Predicated region
    $region18: #{tpu_custom_call.1} parent=1 // pred_check
      _
    $region19: #{tpu_custom_call.1} parent=1 // pred_check_branch
      %60 = sbr.rel (0) target = $region21
    $region20: #{tpu_custom_call.1} parent=1 // pred_region
      _
    $region21: #{tpu_custom_call.1} parent=1 // pred_fallthru
      _
    // Predicated region
    $region22: #{tpu_custom_call.1} parent=1 // pred_check
      _
    $region23: #{tpu_custom_call.1} parent=1 // pred_check_branch
      %62 = sbr.rel (0) target = $region25
    $region24: #{tpu_custom_call.1} parent=1 // pred_region
      %s64 = ssub.s32 16384, 16384
      %65 = vsyncadd [#allocation9], %s64
      %s66 = sshll.u32 [#allocation8], 4
      %s67 = int_to_ptr.vmem [resolvable:$true] %s66
      %72 = dma.hbm_to_vmem [thread:$0]  %s5, 16384, %s67, [#allocation9], 256, 256, 16
    $region25: #{tpu_custom_call.1} parent=1 // pred_fallthru
      _
    // Predicated region
    $region26: #{tpu_custom_call.1} parent=1 // pred_check
      _
    $region27: #{tpu_custom_call.1} parent=1 // pred_check_branch
      %74 = sbr.rel (0) target = $region29
    $region28: #{tpu_custom_call.1} parent=1 // pred_region
      _
    $region29: #{tpu_custom_call.1} parent=1 // pred_fallthru
      _
    // Predicated region
    $region30: #{tpu_custom_call.1} parent=1 // pred_check
      _
    $region31: #{tpu_custom_call.1} parent=1 // pred_check_branch
      %76 = sbr.rel (0) target = $region33
    $region32: #{tpu_custom_call.1} parent=1 // pred_region
      %s78 = ssub.s32 8192, 8192
      %79 = vsyncadd [#allocation9], %s78
      %s80 = sshll.u32 [#allocation10], 4
      %s81 = int_to_ptr.vmem [resolvable:$true] %s80
      %86 = dma.hbm_to_vmem [thread:$0]  %s7, 8192, %s81, [#allocation9], 256, 256, 16
    $region33: #{tpu_custom_call.1} parent=1 // pred_fallthru
      _
    // Predicated region
    $region34: #{tpu_custom_call.1} parent=1 // pred_check
      _
    $region35: #{tpu_custom_call.1} parent=1 // pred_check_branch
      %88 = sbr.rel (0) target = $region37
    $region36: #{tpu_custom_call.1} parent=1 // pred_region
      %s90 = ssub.s32 4096, 4096
      %91 = vsyncadd [#allocation12], %s90
      %s92 = sshll.u32 [#allocation11], 4
      %s93 = int_to_ptr.vmem [resolvable:$true] %s92
      %98 = dma.hbm_to_vmem [thread:$0]  %s8, 4096, %s93, [#allocation12], 256, 256, 16
    $region37: #{tpu_custom_call.1} parent=1 // pred_fallthru
      _
    // Predicated region
    $region38: #{tpu_custom_call.1} parent=1 // pred_check
      _
    $region39: #{tpu_custom_call.1} parent=1 // pred_check_branch
      %100 = sbr.rel (0) target = $region41
    $region40: #{tpu_custom_call.1} parent=1 // pred_region
      _
    $region41: #{tpu_custom_call.1} parent=1 // pred_fallthru
      _
    // Predicated region
    $region42: #{tpu_custom_call.1} parent=1 // pred_check
      _
    $region43: #{tpu_custom_call.1} parent=1 // pred_check_branch
      %102 = sbr.rel (0) target = $region45
    $region44: #{tpu_custom_call.1} parent=1 // pred_region
      %103 = dma.done [#allocation3], 32
    $region45: #{tpu_custom_call.1} parent=1 // pred_fallthru
      _
    // Predicated region
    $region46: #{tpu_custom_call.1} parent=1 // pred_check
      _
    $region47: #{tpu_custom_call.1} parent=1 // pred_check_branch
      %105 = sbr.rel (0) target = $region49
    $region48: #{tpu_custom_call.1} parent=1 // pred_region
      %106 = dma.done [#allocation6], 16384
    $region49: #{tpu_custom_call.1} parent=1 // pred_fallthru
      _
    // Predicated region
    $region50: #{tpu_custom_call.1} parent=1 // pred_check
      _
    $region51: #{tpu_custom_call.1} parent=1 // pred_check_branch
      %108 = sbr.rel (0) target = $region53
    $region52: #{tpu_custom_call.1} parent=1 // pred_region
      %109 = dma.done [#allocation6], 8192
    $region53: #{tpu_custom_call.1} parent=1 // pred_fallthru
      _
    // Predicated region
    $region54: #{tpu_custom_call.1} parent=1 // pred_check
      _
    $region55: #{tpu_custom_call.1} parent=1 // pred_check_branch
      %111 = sbr.rel (0) target = $region57
    $region56: #{tpu_custom_call.1} parent=1 // pred_region
      %112 = dma.done [#allocation9], 16384
    $region57: #{tpu_custom_call.1} parent=1 // pred_fallthru
      _
    // Predicated region
    $region58: #{tpu_custom_call.1} parent=1 // pred_check
      _
    $region59: #{tpu_custom_call.1} parent=1 // pred_check_branch
      %114 = sbr.rel (0) target = $region61
    $region60: #{tpu_custom_call.1} parent=1 // pred_region
      %115 = dma.done [#allocation9], 8192
    $region61: #{tpu_custom_call.1} parent=1 // pred_fallthru
      _
    // Predicated region
    $region62: #{tpu_custom_call.1} parent=1 // pred_check
      _
    $region63: #{tpu_custom_call.1} parent=1 // pred_check_branch
      %117 = sbr.rel (0) target = $region65
    $region64: #{tpu_custom_call.1} parent=1 // pred_region
      %118 = dma.done [#allocation12], 4096
    $region65: #{tpu_custom_call.1} parent=1 // pred_fallthru
      _
    %v119 = vld [vmem:[#allocation2] sm:$0x3]
    %v120 = vld [vmem:[%s1] sm:$0x1]
    %v121 = vld [vmem:[#allocation5] sm:$0xff]
    %v122 = vld [vmem:[#allocation5 + $0x8] sm:$0xff]
    %v123 = vld [vmem:[#allocation5 + $0x10] sm:$0xff]
    %v124 = vld [vmem:[#allocation5 + $0x18] sm:$0xff]
    %v125 = vld [vmem:[#allocation5 + $0x20] sm:$0xff]
    %v126 = vld [vmem:[#allocation5 + $0x28] sm:$0xff]
    %v127 = vld [vmem:[#allocation5 + $0x30] sm:$0xff]
    %v128 = vld [vmem:[#allocation5 + $0x38] sm:$0xff]
    %v129 = vld [vmem:[#allocation5 + $0x40] sm:$0xff]
    %v130 = vld [vmem:[#allocation5 + $0x48] sm:$0xff]
    %v131 = vld [vmem:[#allocation5 + $0x50] sm:$0xff]
    %v132 = vld [vmem:[#allocation5 + $0x58] sm:$0xff]
    %v133 = vld [vmem:[#allocation5 + $0x60] sm:$0xff]
    %v134 = vld [vmem:[#allocation5 + $0x68] sm:$0xff]
    %v135 = vld [vmem:[#allocation5 + $0x70] sm:$0xff]
    %v136 = vld [vmem:[#allocation5 + $0x78] sm:$0xff]
    %v137 = vld [vmem:[#allocation5 + $0x80] sm:$0xff]
    %v138 = vld [vmem:[#allocation5 + $0x88] sm:$0xff]
    %v139 = vld [vmem:[#allocation5 + $0x90] sm:$0xff]
    %v140 = vld [vmem:[#allocation5 + $0x98] sm:$0xff]
    %v141 = vld [vmem:[#allocation5 + $0xa0] sm:$0xff]
    %v142 = vld [vmem:[#allocation5 + $0xa8] sm:$0xff]
    %v143 = vld [vmem:[#allocation5 + $0xb0] sm:$0xff]
    %v144 = vld [vmem:[#allocation5 + $0xb8] sm:$0xff]
    %v145 = vld [vmem:[#allocation5 + $0xc0] sm:$0xff]
    %v146 = vld [vmem:[#allocation5 + $0xc8] sm:$0xff]
    %v147 = vld [vmem:[#allocation5 + $0xd0] sm:$0xff]
    %v148 = vld [vmem:[#allocation5 + $0xd8] sm:$0xff]
    %v149 = vld [vmem:[#allocation5 + $0xe0] sm:$0xff]
    %v150 = vld [vmem:[#allocation5 + $0xe8] sm:$0xff]
    %v151 = vld [vmem:[#allocation5 + $0xf0] sm:$0xff]
    %v152 = vld [vmem:[#allocation5 + $0xf8] sm:$0xff]
    %v153 = vld [vmem:[#allocation5 + $0x100] sm:$0xff]
    %v154 = vld [vmem:[#allocation5 + $0x108] sm:$0xff]
    %v155 = vld [vmem:[#allocation5 + $0x110] sm:$0xff]
    %v156 = vld [vmem:[#allocation5 + $0x118] sm:$0xff]
    %v157 = vld [vmem:[#allocation5 + $0x120] sm:$0xff]
    %v158 = vld [vmem:[#allocation5 + $0x128] sm:$0xff]
    %v159 = vld [vmem:[#allocation5 + $0x130] sm:$0xff]
    %v160 = vld [vmem:[#allocation5 + $0x138] sm:$0xff]
    %v161 = vld [vmem:[#allocation5 + $0x140] sm:$0xff]
    %v162 = vld [vmem:[#allocation5 + $0x148] sm:$0xff]
    %v163 = vld [vmem:[#allocation5 + $0x150] sm:$0xff]
    %v164 = vld [vmem:[#allocation5 + $0x158] sm:$0xff]
    %v165 = vld [vmem:[#allocation5 + $0x160] sm:$0xff]
    %v166 = vld [vmem:[#allocation5 + $0x168] sm:$0xff]
    %v167 = vld [vmem:[#allocation5 + $0x170] sm:$0xff]
    %v168 = vld [vmem:[#allocation5 + $0x178] sm:$0xff]
    %v169 = vld [vmem:[#allocation5 + $0x180] sm:$0xff]
    %v170 = vld [vmem:[#allocation5 + $0x188] sm:$0xff]
    %v171 = vld [vmem:[#allocation5 + $0x190] sm:$0xff]
    %v172 = vld [vmem:[#allocation5 + $0x198] sm:$0xff]
    %v173 = vld [vmem:[#allocation5 + $0x1a0] sm:$0xff]
    %v174 = vld [vmem:[#allocation5 + $0x1a8] sm:$0xff]
    %v175 = vld [vmem:[#allocation5 + $0x1b0] sm:$0xff]
    %v176 = vld [vmem:[#allocation5 + $0x1b8] sm:$0xff]
    %v177 = vld [vmem:[#allocation5 + $0x1c0] sm:$0xff]
    %v178 = vld [vmem:[#allocation5 + $0x1c8] sm:$0xff]
    %v179 = vld [vmem:[#allocation5 + $0x1d0] sm:$0xff]
    %v180 = vld [vmem:[#allocation5 + $0x1d8] sm:$0xff]
    %v181 = vld [vmem:[#allocation5 + $0x1e0] sm:$0xff]
    %v182 = vld [vmem:[#allocation5 + $0x1e8] sm:$0xff]
    %v183 = vld [vmem:[#allocation5 + $0x1f0] sm:$0xff]
    %v184 = vld [vmem:[#allocation5 + $0x1f8] sm:$0xff]
    %v185 = vld [vmem:[#allocation5 + $0x200] sm:$0xff]
    %v186 = vld [vmem:[#allocation5 + $0x208] sm:$0xff]
    %v187 = vld [vmem:[#allocation5 + $0x210] sm:$0xff]
    %v188 = vld [vmem:[#allocation5 + $0x218] sm:$0xff]
    %v189 = vld [vmem:[#allocation5 + $0x220] sm:$0xff]
    %v190 = vld [vmem:[#allocation5 + $0x228] sm:$0xff]
    %v191 = vld [vmem:[#allocation5 + $0x230] sm:$0xff]
    %v192 = vld [vmem:[#allocation5 + $0x238] sm:$0xff]
    %v193 = vld [vmem:[#allocation5 + $0x240] sm:$0xff]
    %v194 = vld [vmem:[#allocation5 + $0x248] sm:$0xff]
    %v195 = vld [vmem:[#allocation5 + $0x250] sm:$0xff]
    %v196 = vld [vmem:[#allocation5 + $0x258] sm:$0xff]
    %v197 = vld [vmem:[#allocation5 + $0x260] sm:$0xff]
    %v198 = vld [vmem:[#allocation5 + $0x268] sm:$0xff]
    %v199 = vld [vmem:[#allocation5 + $0x270] sm:$0xff]
    %v200 = vld [vmem:[#allocation5 + $0x278] sm:$0xff]
    %v201 = vld [vmem:[#allocation5 + $0x280] sm:$0xff]
    %v202 = vld [vmem:[#allocation5 + $0x288] sm:$0xff]
    %v203 = vld [vmem:[#allocation5 + $0x290] sm:$0xff]
    %v204 = vld [vmem:[#allocation5 + $0x298] sm:$0xff]
    %v205 = vld [vmem:[#allocation5 + $0x2a0] sm:$0xff]
    %v206 = vld [vmem:[#allocation5 + $0x2a8] sm:$0xff]
    %v207 = vld [vmem:[#allocation5 + $0x2b0] sm:$0xff]
    %v208 = vld [vmem:[#allocation5 + $0x2b8] sm:$0xff]
    %v209 = vld [vmem:[#allocation5 + $0x2c0] sm:$0xff]
    %v210 = vld [vmem:[#allocation5 + $0x2c8] sm:$0xff]
    %v211 = vld [vmem:[#allocation5 + $0x2d0] sm:$0xff]
    %v212 = vld [vmem:[#allocation5 + $0x2d8] sm:$0xff]
    %v213 = vld [vmem:[#allocation5 + $0x2e0] sm:$0xff]
    %v214 = vld [vmem:[#allocation5 + $0x2e8] sm:$0xff]
    %v215 = vld [vmem:[#allocation5 + $0x2f0] sm:$0xff]
    %v216 = vld [vmem:[#allocation5 + $0x2f8] sm:$0xff]
    %v217 = vld [vmem:[#allocation5 + $0x300] sm:$0xff]
    %v218 = vld [vmem:[#allocation5 + $0x308] sm:$0xff]
    %v219 = vld [vmem:[#allocation5 + $0x310] sm:$0xff]
    %v220 = vld [vmem:[#allocation5 + $0x318] sm:$0xff]
    %v221 = vld [vmem:[#allocation5 + $0x320] sm:$0xff]
    %v222 = vld [vmem:[#allocation5 + $0x328] sm:$0xff]
    %v223 = vld [vmem:[#allocation5 + $0x330] sm:$0xff]
    %v224 = vld [vmem:[#allocation5 + $0x338] sm:$0xff]
    %v225 = vld [vmem:[#allocation5 + $0x340] sm:$0xff]
    %v226 = vld [vmem:[#allocation5 + $0x348] sm:$0xff]
    %v227 = vld [vmem:[#allocation5 + $0x350] sm:$0xff]
    %v228 = vld [vmem:[#allocation5 + $0x358] sm:$0xff]
    %v229 = vld [vmem:[#allocation5 + $0x360] sm:$0xff]
    %v230 = vld [vmem:[#allocation5 + $0x368] sm:$0xff]
    %v231 = vld [vmem:[#allocation5 + $0x370] sm:$0xff]
    %v232 = vld [vmem:[#allocation5 + $0x378] sm:$0xff]
    %v233 = vld [vmem:[#allocation5 + $0x380] sm:$0xff]
    %v234 = vld [vmem:[#allocation5 + $0x388] sm:$0xff]
    %v235 = vld [vmem:[#allocation5 + $0x390] sm:$0xff]
    %v236 = vld [vmem:[#allocation5 + $0x398] sm:$0xff]
    %v237 = vld [vmem:[#allocation5 + $0x3a0] sm:$0xff]
    %v238 = vld [vmem:[#allocation5 + $0x3a8] sm:$0xff]
    %v239 = vld [vmem:[#allocation5 + $0x3b0] sm:$0xff]
    %v240 = vld [vmem:[#allocation5 + $0x3b8] sm:$0xff]
    %v241 = vld [vmem:[#allocation5 + $0x3c0] sm:$0xff]
    %v242 = vld [vmem:[#allocation5 + $0x3c8] sm:$0xff]
    %v243 = vld [vmem:[#allocation5 + $0x3d0] sm:$0xff]
    %v244 = vld [vmem:[#allocation5 + $0x3d8] sm:$0xff]
    %v245 = vld [vmem:[#allocation5 + $0x3e0] sm:$0xff]
    %v246 = vld [vmem:[#allocation5 + $0x3e8] sm:$0xff]
    %v247 = vld [vmem:[#allocation5 + $0x3f0] sm:$0xff]
    %v248 = vld [vmem:[#allocation5 + $0x3f8] sm:$0xff]
    %v249 = vld [vmem:[#allocation7] sm:$0xff]
    %v250 = vld [vmem:[#allocation7 + $0x8] sm:$0xff]
    %v251 = vld [vmem:[#allocation7 + $0x10] sm:$0xff]
    %v252 = vld [vmem:[#allocation7 + $0x18] sm:$0xff]
    %v253 = vld [vmem:[#allocation7 + $0x20] sm:$0xff]
    %v254 = vld [vmem:[#allocation7 + $0x28] sm:$0xff]
    %v255 = vld [vmem:[#allocation7 + $0x30] sm:$0xff]
    %v256 = vld [vmem:[#allocation7 + $0x38] sm:$0xff]
    %v257 = vld [vmem:[#allocation7 + $0x40] sm:$0xff]
    %v258 = vld [vmem:[#allocation7 + $0x48] sm:$0xff]
    %v259 = vld [vmem:[#allocation7 + $0x50] sm:$0xff]
    %v260 = vld [vmem:[#allocation7 + $0x58] sm:$0xff]
    %v261 = vld [vmem:[#allocation7 + $0x60] sm:$0xff]
    %v262 = vld [vmem:[#allocation7 + $0x68] sm:$0xff]
    %v263 = vld [vmem:[#allocation7 + $0x70] sm:$0xff]
    %v264 = vld [vmem:[#allocation7 + $0x78] sm:$0xff]
    %v265 = vld [vmem:[#allocation7 + $0x80] sm:$0xff]
    %v266 = vld [vmem:[#allocation7 + $0x88] sm:$0xff]
    %v267 = vld [vmem:[#allocation7 + $0x90] sm:$0xff]
    %v268 = vld [vmem:[#allocation7 + $0x98] sm:$0xff]
    %v269 = vld [vmem:[#allocation7 + $0xa0] sm:$0xff]
    %v270 = vld [vmem:[#allocation7 + $0xa8] sm:$0xff]
    %v271 = vld [vmem:[#allocation7 + $0xb0] sm:$0xff]
    %v272 = vld [vmem:[#allocation7 + $0xb8] sm:$0xff]
    %v273 = vld [vmem:[#allocation7 + $0xc0] sm:$0xff]
    %v274 = vld [vmem:[#allocation7 + $0xc8] sm:$0xff]
    %v275 = vld [vmem:[#allocation7 + $0xd0] sm:$0xff]
    %v276 = vld [vmem:[#allocation7 + $0xd8] sm:$0xff]
    %v277 = vld [vmem:[#allocation7 + $0xe0] sm:$0xff]
    %v278 = vld [vmem:[#allocation7 + $0xe8] sm:$0xff]
    %v279 = vld [vmem:[#allocation7 + $0xf0] sm:$0xff]
    %v280 = vld [vmem:[#allocation7 + $0xf8] sm:$0xff]
    %v281 = vld [vmem:[#allocation7 + $0x100] sm:$0xff]
    %v282 = vld [vmem:[#allocation7 + $0x108] sm:$0xff]
    %v283 = vld [vmem:[#allocation7 + $0x110] sm:$0xff]
    %v284 = vld [vmem:[#allocation7 + $0x118] sm:$0xff]
    %v285 = vld [vmem:[#allocation7 + $0x120] sm:$0xff]
    %v286 = vld [vmem:[#allocation7 + $0x128] sm:$0xff]
    %v287 = vld [vmem:[#allocation7 + $0x130] sm:$0xff]
    %v288 = vld [vmem:[#allocation7 + $0x138] sm:$0xff]
    %v289 = vld [vmem:[#allocation7 + $0x140] sm:$0xff]
    %v290 = vld [vmem:[#allocation7 + $0x148] sm:$0xff]
    %v291 = vld [vmem:[#allocation7 + $0x150] sm:$0xff]
    %v292 = vld [vmem:[#allocation7 + $0x158] sm:$0xff]
    %v293 = vld [vmem:[#allocation7 + $0x160] sm:$0xff]
    %v294 = vld [vmem:[#allocation7 + $0x168] sm:$0xff]
    %v295 = vld [vmem:[#allocation7 + $0x170] sm:$0xff]
    %v296 = vld [vmem:[#allocation7 + $0x178] sm:$0xff]
    %v297 = vld [vmem:[#allocation7 + $0x180] sm:$0xff]
    %v298 = vld [vmem:[#allocation7 + $0x188] sm:$0xff]
    %v299 = vld [vmem:[#allocation7 + $0x190] sm:$0xff]
    %v300 = vld [vmem:[#allocation7 + $0x198] sm:$0xff]
    %v301 = vld [vmem:[#allocation7 + $0x1a0] sm:$0xff]
    %v302 = vld [vmem:[#allocation7 + $0x1a8] sm:$0xff]
    %v303 = vld [vmem:[#allocation7 + $0x1b0] sm:$0xff]
    %v304 = vld [vmem:[#allocation7 + $0x1b8] sm:$0xff]
    %v305 = vld [vmem:[#allocation7 + $0x1c0] sm:$0xff]
    %v306 = vld [vmem:[#allocation7 + $0x1c8] sm:$0xff]
    %v307 = vld [vmem:[#allocation7 + $0x1d0] sm:$0xff]
    %v308 = vld [vmem:[#allocation7 + $0x1d8] sm:$0xff]
    %v309 = vld [vmem:[#allocation7 + $0x1e0] sm:$0xff]
    %v310 = vld [vmem:[#allocation7 + $0x1e8] sm:$0xff]
    %v311 = vld [vmem:[#allocation7 + $0x1f0] sm:$0xff]
    %v312 = vld [vmem:[#allocation7 + $0x1f8] sm:$0xff]
    %313 = vmatprep.subr.mxu0 %v250
    %314 = vmatpush1.msra.mxu0 %v249
    %315 = vmatprep.subr.mxu0 %v254
    %316 = vmatpush1.msra.mxu0 %v253
    %317 = vmatprep.subr.mxu0 %v258
    %318 = vmatpush1.msra.mxu0 %v257
    %319 = vmatprep.subr.mxu0 %v262
    %320 = vmatpush1.msra.mxu0 %v261
    %321 = vmatprep.subr.mxu0 %v266
    %322 = vmatpush1.msra.mxu0 %v265
    %323 = vmatprep.subr.mxu0 %v270
    %324 = vmatpush1.msra.mxu0 %v269
    %325 = vmatprep.subr.mxu0 %v274
    %326 = vmatpush1.msra.mxu0 %v273
    %327 = vmatprep.subr.mxu0 %v278
    %328 = vmatpush1.msra.mxu0 %v277
    %329 = vmatprep.subr.mxu0 %v282
    %330 = vmatpush1.msra.mxu0 %v281
    %331 = vmatprep.subr.mxu0 %v286
    %332 = vmatpush1.msra.mxu0 %v285
    %333 = vmatprep.subr.mxu0 %v290
    %334 = vmatpush1.msra.mxu0 %v289
    %335 = vmatprep.subr.mxu0 %v294
    %336 = vmatpush1.msra.mxu0 %v293
    %337 = vmatprep.subr.mxu0 %v298
    %338 = vmatpush1.msra.mxu0 %v297
    %339 = vmatprep.subr.mxu0 %v302
    %340 = vmatpush1.msra.mxu0 %v301
    %341 = vmatprep.subr.mxu0 %v306
    %342 = vmatpush1.msra.mxu0 %v305
    %343 = vmatprep.subr.mxu0 %v310
    %344 = vmatpush1.msra.mxu0 %v309
    %345 = vmatprep.subr.mxu0 0.0
    %346 = vmatpush1.msra.mxu0 0.0
    %347 = vmatprep.subr.mxu0 0.0
    %348 = vmatpush1.msra.mxu0 0.0
    %349 = vmatprep.subr.mxu0 0.0
    %350 = vmatpush1.msra.mxu0 0.0
    %351 = vmatprep.subr.mxu0 0.0
    %352 = vmatpush1.msra.mxu0 0.0
    %353 = vmatprep.subr.mxu0 0.0
    %354 = vmatpush1.msra.mxu0 0.0
    %355 = vmatprep.subr.mxu0 0.0
    %356 = vmatpush1.msra.mxu0 0.0
    %357 = vmatprep.subr.mxu0 0.0
    %358 = vmatpush1.msra.mxu0 0.0
    %359 = vmatprep.subr.mxu0 0.0
    %360 = vmatpush1.msra.mxu0 0.0
    %361 = vmatprep.subr.mxu0 0.0
    %362 = vmatpush1.msra.mxu0 0.0
    %363 = vmatprep.subr.mxu0 0.0
    %364 = vmatpush1.msra.mxu0 0.0
    %365 = vmatprep.subr.mxu0 0.0
    %366 = vmatpush1.msra.mxu0 0.0
    %367 = vmatprep.subr.mxu0 0.0
    %368 = vmatpush1.msra.mxu0 0.0
    %369 = vmatprep.subr.mxu0 0.0
    %370 = vmatpush1.msra.mxu0 0.0
    %371 = vmatprep.subr.mxu0 0.0
    %372 = vmatpush1.msra.mxu0 0.0
    %373 = vmatprep.subr.mxu0 0.0
    %374 = vmatpush1.msra.mxu0 0.0
    %375 = vmatprep.subr.mxu0 0.0
    %376 = vmatpush1.msra.mxu0 0.0
    %377 = vmatprep.mubr.f32.mxu0 0.0
    %378 = vmatmul.mubr.f32.gmra.mrb[0].mxu0 %v120
    %v379 = vpop.f32.mrb[0].mxu0
    %v380 = vadd.f32 0.0, %v379
    %v381 = vpop.f32.mrb[0].mxu0
    %v382 = vadd.f32 0.0, %v381
    %383 = vdwg.mxu0
    %384 = vmatprep.subr.mxu0 %v252
    %385 = vmatpush1.msra.mxu0 %v251
    %386 = vmatprep.subr.mxu0 %v256
    %387 = vmatpush1.msra.mxu0 %v255
    %388 = vmatprep.subr.mxu0 %v260
    %389 = vmatpush1.msra.mxu0 %v259
    %390 = vmatprep.subr.mxu0 %v264
    %391 = vmatpush1.msra.mxu0 %v263
    %392 = vmatprep.subr.mxu0 %v268
    %393 = vmatpush1.msra.mxu0 %v267
    %394 = vmatprep.subr.mxu0 %v272
    %395 = vmatpush1.msra.mxu0 %v271
    %396 = vmatprep.subr.mxu0 %v276
    %397 = vmatpush1.msra.mxu0 %v275
    %398 = vmatprep.subr.mxu0 %v280
    %399 = vmatpush1.msra.mxu0 %v279
    %400 = vmatprep.subr.mxu0 %v284
    %401 = vmatpush1.msra.mxu0 %v283
    %402 = vmatprep.subr.mxu0 %v288
    %403 = vmatpush1.msra.mxu0 %v287
    %404 = vmatprep.subr.mxu0 %v292
    %405 = vmatpush1.msra.mxu0 %v291
    %406 = vmatprep.subr.mxu0 %v296
    %407 = vmatpush1.msra.mxu0 %v295
    %408 = vmatprep.subr.mxu0 %v300
    %409 = vmatpush1.msra.mxu0 %v299
    %410 = vmatprep.subr.mxu0 %v304
    %411 = vmatpush1.msra.mxu0 %v303
    %412 = vmatprep.subr.mxu0 %v308
    %413 = vmatpush1.msra.mxu0 %v307
    %414 = vmatprep.subr.mxu0 %v312
    %415 = vmatpush1.msra.mxu0 %v311
    %416 = vmatprep.subr.mxu0 0.0
    %417 = vmatpush1.msra.mxu0 0.0
    %418 = vmatprep.subr.mxu0 0.0
    %419 = vmatpush1.msra.mxu0 0.0
    %420 = vmatprep.subr.mxu0 0.0
    %421 = vmatpush1.msra.mxu0 0.0
    %422 = vmatprep.subr.mxu0 0.0
    %423 = vmatpush1.msra.mxu0 0.0
    %424 = vmatprep.subr.mxu0 0.0
    %425 = vmatpush1.msra.mxu0 0.0
    %426 = vmatprep.subr.mxu0 0.0
    %427 = vmatpush1.msra.mxu0 0.0
    %428 = vmatprep.subr.mxu0 0.0
    %429 = vmatpush1.msra.mxu0 0.0
    %430 = vmatprep.subr.mxu0 0.0
    %431 = vmatpush1.msra.mxu0 0.0
    %432 = vmatprep.subr.mxu0 0.0
    %433 = vmatpush1.msra.mxu0 0.0
    %434 = vmatprep.subr.mxu0 0.0
    %435 = vmatpush1.msra.mxu0 0.0
    %436 = vmatprep.subr.mxu0 0.0
    %437 = vmatpush1.msra.mxu0 0.0
    %438 = vmatprep.subr.mxu0 0.0
    %439 = vmatpush1.msra.mxu0 0.0
    %440 = vmatprep.subr.mxu0 0.0
    %441 = vmatpush1.msra.mxu0 0.0
    %442 = vmatprep.subr.mxu0 0.0
    %443 = vmatpush1.msra.mxu0 0.0
    %444 = vmatprep.subr.mxu0 0.0
    %445 = vmatpush1.msra.mxu0 0.0
    %446 = vmatprep.subr.mxu0 0.0
    %447 = vmatpush1.msra.mxu0 0.0
    %448 = vmatprep.mubr.f32.mxu0 0.0
    %449 = vmatmul.mubr.f32.gmra.mrb[0].mxu0 %v120
    %v450 = vpop.f32.mrb[0].mxu0
    %v451 = vadd.f32 0.0, %v450
    %v452 = vpop.f32.mrb[0].mxu0
    %v453 = vadd.f32 0.0, %v452
    %454 = vdwg.mxu0
    %v456 = vlaneseq
    %v457 = vshrl.u32 %v456, 7
    %v458 = vsub.s32 0, %v457
    %v459 = vrot.slane %v119, %v458
    %v460 = vlaneseq
    %v461 = vshrl.u32 %v460, 7
    %v462 = vsub.s32 1, %v461
    %v463 = vrot.slane %v119, %v462
    %466 = vmatprep.subr.mxu0 %v122
    %467 = vmatpush1.msra.mxu0 %v121
    %468 = vmatprep.subr.mxu0 %v126
    %469 = vmatpush1.msra.mxu0 %v125
    %470 = vmatprep.subr.mxu0 %v130
    %471 = vmatpush1.msra.mxu0 %v129
    %472 = vmatprep.subr.mxu0 %v134
    %473 = vmatpush1.msra.mxu0 %v133
    %474 = vmatprep.subr.mxu0 %v138
    %475 = vmatpush1.msra.mxu0 %v137
    %476 = vmatprep.subr.mxu0 %v142
    %477 = vmatpush1.msra.mxu0 %v141
    %478 = vmatprep.subr.mxu0 %v146
    %479 = vmatpush1.msra.mxu0 %v145
    %480 = vmatprep.subr.mxu0 %v150
    %481 = vmatpush1.msra.mxu0 %v149
    %482 = vmatprep.subr.mxu0 %v154
    %483 = vmatpush1.msra.mxu0 %v153
    %484 = vmatprep.subr.mxu0 %v158
    %485 = vmatpush1.msra.mxu0 %v157
    %486 = vmatprep.subr.mxu0 %v162
    %487 = vmatpush1.msra.mxu0 %v161
    %488 = vmatprep.subr.mxu0 %v166
    %489 = vmatpush1.msra.mxu0 %v165
    %490 = vmatprep.subr.mxu0 %v170
    %491 = vmatpush1.msra.mxu0 %v169
    %492 = vmatprep.subr.mxu0 %v174
    %493 = vmatpush1.msra.mxu0 %v173
    %494 = vmatprep.subr.mxu0 %v178
    %495 = vmatpush1.msra.mxu0 %v177
    %496 = vmatprep.subr.mxu0 %v182
    %497 = vmatpush1.msra.mxu0 %v181
    %498 = vmatprep.subr.mxu0 %v186
    %499 = vmatpush1.msra.mxu0 %v185
    %500 = vmatprep.subr.mxu0 %v190
    %501 = vmatpush1.msra.mxu0 %v189
    %502 = vmatprep.subr.mxu0 %v194
    %503 = vmatpush1.msra.mxu0 %v193
    %504 = vmatprep.subr.mxu0 %v198
    %505 = vmatpush1.msra.mxu0 %v197
    %506 = vmatprep.subr.mxu0 %v202
    %507 = vmatpush1.msra.mxu0 %v201
    %508 = vmatprep.subr.mxu0 %v206
    %509 = vmatpush1.msra.mxu0 %v205
    %510 = vmatprep.subr.mxu0 %v210
    %511 = vmatpush1.msra.mxu0 %v209
    %512 = vmatprep.subr.mxu0 %v214
    %513 = vmatpush1.msra.mxu0 %v213
    %514 = vmatprep.subr.mxu0 %v218
    %515 = vmatpush1.msra.mxu0 %v217
    %516 = vmatprep.subr.mxu0 %v222
    %517 = vmatpush1.msra.mxu0 %v221
    %518 = vmatprep.subr.mxu0 %v226
    %519 = vmatpush1.msra.mxu0 %v225
    %520 = vmatprep.subr.mxu0 %v230
    %521 = vmatpush1.msra.mxu0 %v229
    %522 = vmatprep.subr.mxu0 %v234
    %523 = vmatpush1.msra.mxu0 %v233
    %524 = vmatprep.subr.mxu0 %v238
    %525 = vmatpush1.msra.mxu0 %v237
    %526 = vmatprep.subr.mxu0 %v242
    %527 = vmatpush1.msra.mxu0 %v241
    %528 = vmatprep.subr.mxu0 %v246
    %529 = vmatpush1.msra.mxu0 %v245
    %530 = vmatprep.mubr.f32.mxu0 %v463
    %531 = vmatmul.mubr.f32.gmra.mrb[0].mxu0 %v459
    %v532 = vpop.f32.mrb[0].mxu0
    %v533 = vadd.f32 %v380, %v532
    %v534 = vpop.f32.mrb[0].mxu0
    %v535 = vadd.f32 %v382, %v534
    %536 = vdwg.mxu0
    %537 = vmatprep.subr.mxu0 %v124
    %538 = vmatpush1.msra.mxu0 %v123
    %539 = vmatprep.subr.mxu0 %v128
    %540 = vmatpush1.msra.mxu0 %v127
    %541 = vmatprep.subr.mxu0 %v132
    %542 = vmatpush1.msra.mxu0 %v131
    %543 = vmatprep.subr.mxu0 %v136
    %544 = vmatpush1.msra.mxu0 %v135
    %545 = vmatprep.subr.mxu0 %v140
    %546 = vmatpush1.msra.mxu0 %v139
    %547 = vmatprep.subr.mxu0 %v144
    %548 = vmatpush1.msra.mxu0 %v143
    %549 = vmatprep.subr.mxu0 %v148
    %550 = vmatpush1.msra.mxu0 %v147
    %551 = vmatprep.subr.mxu0 %v152
    %552 = vmatpush1.msra.mxu0 %v151
    %553 = vmatprep.subr.mxu0 %v156
    %554 = vmatpush1.msra.mxu0 %v155
    %555 = vmatprep.subr.mxu0 %v160
    %556 = vmatpush1.msra.mxu0 %v159
    %557 = vmatprep.subr.mxu0 %v164
    %558 = vmatpush1.msra.mxu0 %v163
    %559 = vmatprep.subr.mxu0 %v168
    %560 = vmatpush1.msra.mxu0 %v167
    %561 = vmatprep.subr.mxu0 %v172
    %562 = vmatpush1.msra.mxu0 %v171
    %563 = vmatprep.subr.mxu0 %v176
    %564 = vmatpush1.msra.mxu0 %v175
    %565 = vmatprep.subr.mxu0 %v180
    %566 = vmatpush1.msra.mxu0 %v179
    %567 = vmatprep.subr.mxu0 %v184
    %568 = vmatpush1.msra.mxu0 %v183
    %569 = vmatprep.subr.mxu0 %v188
    %570 = vmatpush1.msra.mxu0 %v187
    %571 = vmatprep.subr.mxu0 %v192
    %572 = vmatpush1.msra.mxu0 %v191
    %573 = vmatprep.subr.mxu0 %v196
    %574 = vmatpush1.msra.mxu0 %v195
    %575 = vmatprep.subr.mxu0 %v200
    %576 = vmatpush1.msra.mxu0 %v199
    %577 = vmatprep.subr.mxu0 %v204
    %578 = vmatpush1.msra.mxu0 %v203
    %579 = vmatprep.subr.mxu0 %v208
    %580 = vmatpush1.msra.mxu0 %v207
    %581 = vmatprep.subr.mxu0 %v212
    %582 = vmatpush1.msra.mxu0 %v211
    %583 = vmatprep.subr.mxu0 %v216
    %584 = vmatpush1.msra.mxu0 %v215
    %585 = vmatprep.subr.mxu0 %v220
    %586 = vmatpush1.msra.mxu0 %v219
    %587 = vmatprep.subr.mxu0 %v224
    %588 = vmatpush1.msra.mxu0 %v223
    %589 = vmatprep.subr.mxu0 %v228
    %590 = vmatpush1.msra.mxu0 %v227
    %591 = vmatprep.subr.mxu0 %v232
    %592 = vmatpush1.msra.mxu0 %v231
    %593 = vmatprep.subr.mxu0 %v236
    %594 = vmatpush1.msra.mxu0 %v235
    %595 = vmatprep.subr.mxu0 %v240
    %596 = vmatpush1.msra.mxu0 %v239
    %597 = vmatprep.subr.mxu0 %v244
    %598 = vmatpush1.msra.mxu0 %v243
    %599 = vmatprep.subr.mxu0 %v248
    %600 = vmatpush1.msra.mxu0 %v247
    %601 = vmatprep.mubr.f32.mxu0 %v463
    %602 = vmatmul.mubr.f32.gmra.mrb[0].mxu0 %v459
    %v603 = vpop.f32.mrb[0].mxu0
    %v604 = vadd.f32 %v451, %v603
    %v605 = vpop.f32.mrb[0].mxu0
    %v606 = vadd.f32 %v453, %v605
    %607 = vdwg.mxu0
    %v608 = vld [vmem:[%s4] sm:$0xf]
    %v610 = vlaneseq
    %v611 = vshrl.u32 %v610, 7
    %v612 = vsub.s32 0, %v611
    %v613 = vrot.slane %v608, %v612
    %v614 = vlaneseq
    %v615 = vshrl.u32 %v614, 7
    %v616 = vsub.s32 1, %v615
    %v617 = vrot.slane %v608, %v616
    %v618 = vlaneseq
    %v619 = vshrl.u32 %v618, 7
    %v620 = vsub.s32 2, %v619
    %v621 = vrot.slane %v608, %v620
    %v622 = vlaneseq
    %v623 = vshrl.u32 %v622, 7
    %v624 = vsub.s32 3, %v623
    %v625 = vrot.slane %v608, %v624
    %v630 = vadd.f32 %v533, %v613
    %v631 = vadd.f32 %v535, %v617
    %v632 = vadd.f32 %v604, %v621
    %v633 = vadd.f32 %v606, %v625
    %v634 = vmax.f32 %v630, 0.0
    %v635 = vmax.f32 %v631, 0.0
    %v636 = vmax.f32 %v632, 0.0
    %v637 = vmax.f32 %v633, 0.0
    %v638 = vld [vmem:[#allocation8] sm:$0xff]
    %v639 = vld [vmem:[#allocation8 + $0x8] sm:$0xff]
    %v640 = vld [vmem:[#allocation8 + $0x10] sm:$0xff]
    %v641 = vld [vmem:[#allocation8 + $0x18] sm:$0xff]
    %v642 = vld [vmem:[#allocation8 + $0x20] sm:$0xff]
    %v643 = vld [vmem:[#allocation8 + $0x28] sm:$0xff]
    %v644 = vld [vmem:[#allocation8 + $0x30] sm:$0xff]
    %v645 = vld [vmem:[#allocation8 + $0x38] sm:$0xff]
    %v646 = vld [vmem:[#allocation8 + $0x40] sm:$0xff]
    %v647 = vld [vmem:[#allocation8 + $0x48] sm:$0xff]
    %v648 = vld [vmem:[#allocation8 + $0x50] sm:$0xff]
    %v649 = vld [vmem:[#allocation8 + $0x58] sm:$0xff]
    %v650 = vld [vmem:[#allocation8 + $0x60] sm:$0xff]
    %v651 = vld [vmem:[#allocation8 + $0x68] sm:$0xff]
    %v652 = vld [vmem:[#allocation8 + $0x70] sm:$0xff]
    %v653 = vld [vmem:[#allocation8 + $0x78] sm:$0xff]
    %v654 = vld [vmem:[#allocation8 + $0x80] sm:$0xff]
    %v655 = vld [vmem:[#allocation8 + $0x88] sm:$0xff]
    %v656 = vld [vmem:[#allocation8 + $0x90] sm:$0xff]
    %v657 = vld [vmem:[#allocation8 + $0x98] sm:$0xff]
    %v658 = vld [vmem:[#allocation8 + $0xa0] sm:$0xff]
    %v659 = vld [vmem:[#allocation8 + $0xa8] sm:$0xff]
    %v660 = vld [vmem:[#allocation8 + $0xb0] sm:$0xff]
    %v661 = vld [vmem:[#allocation8 + $0xb8] sm:$0xff]
    %v662 = vld [vmem:[#allocation8 + $0xc0] sm:$0xff]
    %v663 = vld [vmem:[#allocation8 + $0xc8] sm:$0xff]
    %v664 = vld [vmem:[#allocation8 + $0xd0] sm:$0xff]
    %v665 = vld [vmem:[#allocation8 + $0xd8] sm:$0xff]
    %v666 = vld [vmem:[#allocation8 + $0xe0] sm:$0xff]
    %v667 = vld [vmem:[#allocation8 + $0xe8] sm:$0xff]
    %v668 = vld [vmem:[#allocation8 + $0xf0] sm:$0xff]
    %v669 = vld [vmem:[#allocation8 + $0xf8] sm:$0xff]
    %v670 = vld [vmem:[#allocation8 + $0x100] sm:$0xff]
    %v671 = vld [vmem:[#allocation8 + $0x108] sm:$0xff]
    %v672 = vld [vmem:[#allocation8 + $0x110] sm:$0xff]
    %v673 = vld [vmem:[#allocation8 + $0x118] sm:$0xff]
    %v674 = vld [vmem:[#allocation8 + $0x120] sm:$0xff]
    %v675 = vld [vmem:[#allocation8 + $0x128] sm:$0xff]
    %v676 = vld [vmem:[#allocation8 + $0x130] sm:$0xff]
    %v677 = vld [vmem:[#allocation8 + $0x138] sm:$0xff]
    %v678 = vld [vmem:[#allocation8 + $0x140] sm:$0xff]
    %v679 = vld [vmem:[#allocation8 + $0x148] sm:$0xff]
    %v680 = vld [vmem:[#allocation8 + $0x150] sm:$0xff]
    %v681 = vld [vmem:[#allocation8 + $0x158] sm:$0xff]
    %v682 = vld [vmem:[#allocation8 + $0x160] sm:$0xff]
    %v683 = vld [vmem:[#allocation8 + $0x168] sm:$0xff]
    %v684 = vld [vmem:[#allocation8 + $0x170] sm:$0xff]
    %v685 = vld [vmem:[#allocation8 + $0x178] sm:$0xff]
    %v686 = vld [vmem:[#allocation8 + $0x180] sm:$0xff]
    %v687 = vld [vmem:[#allocation8 + $0x188] sm:$0xff]
    %v688 = vld [vmem:[#allocation8 + $0x190] sm:$0xff]
    %v689 = vld [vmem:[#allocation8 + $0x198] sm:$0xff]
    %v690 = vld [vmem:[#allocation8 + $0x1a0] sm:$0xff]
    %v691 = vld [vmem:[#allocation8 + $0x1a8] sm:$0xff]
    %v692 = vld [vmem:[#allocation8 + $0x1b0] sm:$0xff]
    %v693 = vld [vmem:[#allocation8 + $0x1b8] sm:$0xff]
    %v694 = vld [vmem:[#allocation8 + $0x1c0] sm:$0xff]
    %v695 = vld [vmem:[#allocation8 + $0x1c8] sm:$0xff]
    %v696 = vld [vmem:[#allocation8 + $0x1d0] sm:$0xff]
    %v697 = vld [vmem:[#allocation8 + $0x1d8] sm:$0xff]
    %v698 = vld [vmem:[#allocation8 + $0x1e0] sm:$0xff]
    %v699 = vld [vmem:[#allocation8 + $0x1e8] sm:$0xff]
    %v700 = vld [vmem:[#allocation8 + $0x1f0] sm:$0xff]
    %v701 = vld [vmem:[#allocation8 + $0x1f8] sm:$0xff]
    %v702 = vld [vmem:[#allocation8 + $0x200] sm:$0xff]
    %v703 = vld [vmem:[#allocation8 + $0x208] sm:$0xff]
    %v704 = vld [vmem:[#allocation8 + $0x210] sm:$0xff]
    %v705 = vld [vmem:[#allocation8 + $0x218] sm:$0xff]
    %v706 = vld [vmem:[#allocation8 + $0x220] sm:$0xff]
    %v707 = vld [vmem:[#allocation8 + $0x228] sm:$0xff]
    %v708 = vld [vmem:[#allocation8 + $0x230] sm:$0xff]
    %v709 = vld [vmem:[#allocation8 + $0x238] sm:$0xff]
    %v710 = vld [vmem:[#allocation8 + $0x240] sm:$0xff]
    %v711 = vld [vmem:[#allocation8 + $0x248] sm:$0xff]
    %v712 = vld [vmem:[#allocation8 + $0x250] sm:$0xff]
    %v713 = vld [vmem:[#allocation8 + $0x258] sm:$0xff]
    %v714 = vld [vmem:[#allocation8 + $0x260] sm:$0xff]
    %v715 = vld [vmem:[#allocation8 + $0x268] sm:$0xff]
    %v716 = vld [vmem:[#allocation8 + $0x270] sm:$0xff]
    %v717 = vld [vmem:[#allocation8 + $0x278] sm:$0xff]
    %v718 = vld [vmem:[#allocation8 + $0x280] sm:$0xff]
    %v719 = vld [vmem:[#allocation8 + $0x288] sm:$0xff]
    %v720 = vld [vmem:[#allocation8 + $0x290] sm:$0xff]
    %v721 = vld [vmem:[#allocation8 + $0x298] sm:$0xff]
    %v722 = vld [vmem:[#allocation8 + $0x2a0] sm:$0xff]
    %v723 = vld [vmem:[#allocation8 + $0x2a8] sm:$0xff]
    %v724 = vld [vmem:[#allocation8 + $0x2b0] sm:$0xff]
    %v725 = vld [vmem:[#allocation8 + $0x2b8] sm:$0xff]
    %v726 = vld [vmem:[#allocation8 + $0x2c0] sm:$0xff]
    %v727 = vld [vmem:[#allocation8 + $0x2c8] sm:$0xff]
    %v728 = vld [vmem:[#allocation8 + $0x2d0] sm:$0xff]
    %v729 = vld [vmem:[#allocation8 + $0x2d8] sm:$0xff]
    %v730 = vld [vmem:[#allocation8 + $0x2e0] sm:$0xff]
    %v731 = vld [vmem:[#allocation8 + $0x2e8] sm:$0xff]
    %v732 = vld [vmem:[#allocation8 + $0x2f0] sm:$0xff]
    %v733 = vld [vmem:[#allocation8 + $0x2f8] sm:$0xff]
    %v734 = vld [vmem:[#allocation8 + $0x300] sm:$0xff]
    %v735 = vld [vmem:[#allocation8 + $0x308] sm:$0xff]
    %v736 = vld [vmem:[#allocation8 + $0x310] sm:$0xff]
    %v737 = vld [vmem:[#allocation8 + $0x318] sm:$0xff]
    %v738 = vld [vmem:[#allocation8 + $0x320] sm:$0xff]
    %v739 = vld [vmem:[#allocation8 + $0x328] sm:$0xff]
    %v740 = vld [vmem:[#allocation8 + $0x330] sm:$0xff]
    %v741 = vld [vmem:[#allocation8 + $0x338] sm:$0xff]
    %v742 = vld [vmem:[#allocation8 + $0x340] sm:$0xff]
    %v743 = vld [vmem:[#allocation8 + $0x348] sm:$0xff]
    %v744 = vld [vmem:[#allocation8 + $0x350] sm:$0xff]
    %v745 = vld [vmem:[#allocation8 + $0x358] sm:$0xff]
    %v746 = vld [vmem:[#allocation8 + $0x360] sm:$0xff]
    %v747 = vld [vmem:[#allocation8 + $0x368] sm:$0xff]
    %v748 = vld [vmem:[#allocation8 + $0x370] sm:$0xff]
    %v749 = vld [vmem:[#allocation8 + $0x378] sm:$0xff]
    %v750 = vld [vmem:[#allocation8 + $0x380] sm:$0xff]
    %v751 = vld [vmem:[#allocation8 + $0x388] sm:$0xff]
    %v752 = vld [vmem:[#allocation8 + $0x390] sm:$0xff]
    %v753 = vld [vmem:[#allocation8 + $0x398] sm:$0xff]
    %v754 = vld [vmem:[#allocation8 + $0x3a0] sm:$0xff]
    %v755 = vld [vmem:[#allocation8 + $0x3a8] sm:$0xff]
    %v756 = vld [vmem:[#allocation8 + $0x3b0] sm:$0xff]
    %v757 = vld [vmem:[#allocation8 + $0x3b8] sm:$0xff]
    %v758 = vld [vmem:[#allocation8 + $0x3c0] sm:$0xff]
    %v759 = vld [vmem:[#allocation8 + $0x3c8] sm:$0xff]
    %v760 = vld [vmem:[#allocation8 + $0x3d0] sm:$0xff]
    %v761 = vld [vmem:[#allocation8 + $0x3d8] sm:$0xff]
    %v762 = vld [vmem:[#allocation8 + $0x3e0] sm:$0xff]
    %v763 = vld [vmem:[#allocation8 + $0x3e8] sm:$0xff]
    %v764 = vld [vmem:[#allocation8 + $0x3f0] sm:$0xff]
    %v765 = vld [vmem:[#allocation8 + $0x3f8] sm:$0xff]
    %v766 = vld [vmem:[%s6] sm:$0x3]
    %v768 = vlaneseq
    %v769 = vshrl.u32 %v768, 7
    %v770 = vsub.s32 0, %v769
    %v771 = vrot.slane %v766, %v770
    %v772 = vlaneseq
    %v773 = vshrl.u32 %v772, 7
    %v774 = vsub.s32 1, %v773
    %v775 = vrot.slane %v766, %v774
    %778 = vmatprep.subr.mxu0 %v639
    %779 = vmatpush1.msra.mxu0 %v638
    %780 = vmatprep.subr.mxu0 %v641
    %781 = vmatpush1.msra.mxu0 %v640
    %782 = vmatprep.subr.mxu0 %v643
    %783 = vmatpush1.msra.mxu0 %v642
    %784 = vmatprep.subr.mxu0 %v645
    %785 = vmatpush1.msra.mxu0 %v644
    %786 = vmatprep.subr.mxu0 %v647
    %787 = vmatpush1.msra.mxu0 %v646
    %788 = vmatprep.subr.mxu0 %v649
    %789 = vmatpush1.msra.mxu0 %v648
    %790 = vmatprep.subr.mxu0 %v651
    %791 = vmatpush1.msra.mxu0 %v650
    %792 = vmatprep.subr.mxu0 %v653
    %793 = vmatpush1.msra.mxu0 %v652
    %794 = vmatprep.subr.mxu0 %v655
    %795 = vmatpush1.msra.mxu0 %v654
    %796 = vmatprep.subr.mxu0 %v657
    %797 = vmatpush1.msra.mxu0 %v656
    %798 = vmatprep.subr.mxu0 %v659
    %799 = vmatpush1.msra.mxu0 %v658
    %800 = vmatprep.subr.mxu0 %v661
    %801 = vmatpush1.msra.mxu0 %v660
    %802 = vmatprep.subr.mxu0 %v663
    %803 = vmatpush1.msra.mxu0 %v662
    %804 = vmatprep.subr.mxu0 %v665
    %805 = vmatpush1.msra.mxu0 %v664
    %806 = vmatprep.subr.mxu0 %v667
    %807 = vmatpush1.msra.mxu0 %v666
    %808 = vmatprep.subr.mxu0 %v669
    %809 = vmatpush1.msra.mxu0 %v668
    %810 = vmatprep.subr.mxu0 %v671
    %811 = vmatpush1.msra.mxu0 %v670
    %812 = vmatprep.subr.mxu0 %v673
    %813 = vmatpush1.msra.mxu0 %v672
    %814 = vmatprep.subr.mxu0 %v675
    %815 = vmatpush1.msra.mxu0 %v674
    %816 = vmatprep.subr.mxu0 %v677
    %817 = vmatpush1.msra.mxu0 %v676
    %818 = vmatprep.subr.mxu0 %v679
    %819 = vmatpush1.msra.mxu0 %v678
    %820 = vmatprep.subr.mxu0 %v681
    %821 = vmatpush1.msra.mxu0 %v680
    %822 = vmatprep.subr.mxu0 %v683
    %823 = vmatpush1.msra.mxu0 %v682
    %824 = vmatprep.subr.mxu0 %v685
    %825 = vmatpush1.msra.mxu0 %v684
    %826 = vmatprep.subr.mxu0 %v687
    %827 = vmatpush1.msra.mxu0 %v686
    %828 = vmatprep.subr.mxu0 %v689
    %829 = vmatpush1.msra.mxu0 %v688
    %830 = vmatprep.subr.mxu0 %v691
    %831 = vmatpush1.msra.mxu0 %v690
    %832 = vmatprep.subr.mxu0 %v693
    %833 = vmatpush1.msra.mxu0 %v692
    %834 = vmatprep.subr.mxu0 %v695
    %835 = vmatpush1.msra.mxu0 %v694
    %836 = vmatprep.subr.mxu0 %v697
    %837 = vmatpush1.msra.mxu0 %v696
    %838 = vmatprep.subr.mxu0 %v699
    %839 = vmatpush1.msra.mxu0 %v698
    %840 = vmatprep.subr.mxu0 %v701
    %841 = vmatpush1.msra.mxu0 %v700
    %842 = vmatprep.mubr.f32.mxu0 %v635
    %843 = vmatmul.mubr.f32.gmra.mrb[0].mxu0 %v634
    %v844 = vpop.f32.mrb[0].mxu0
    %v845 = vadd.f32 %v771, %v844
    %v846 = vpop.f32.mrb[0].mxu0
    %v847 = vadd.f32 %v775, %v846
    %848 = vdwg.mxu0
    %849 = vmatprep.subr.mxu0 %v703
    %850 = vmatpush1.msra.mxu0 %v702
    %851 = vmatprep.subr.mxu0 %v705
    %852 = vmatpush1.msra.mxu0 %v704
    %853 = vmatprep.subr.mxu0 %v707
    %854 = vmatpush1.msra.mxu0 %v706
    %855 = vmatprep.subr.mxu0 %v709
    %856 = vmatpush1.msra.mxu0 %v708
    %857 = vmatprep.subr.mxu0 %v711
    %858 = vmatpush1.msra.mxu0 %v710
    %859 = vmatprep.subr.mxu0 %v713
    %860 = vmatpush1.msra.mxu0 %v712
    %861 = vmatprep.subr.mxu0 %v715
    %862 = vmatpush1.msra.mxu0 %v714
    %863 = vmatprep.subr.mxu0 %v717
    %864 = vmatpush1.msra.mxu0 %v716
    %865 = vmatprep.subr.mxu0 %v719
    %866 = vmatpush1.msra.mxu0 %v718
    %867 = vmatprep.subr.mxu0 %v721
    %868 = vmatpush1.msra.mxu0 %v720
    %869 = vmatprep.subr.mxu0 %v723
    %870 = vmatpush1.msra.mxu0 %v722
    %871 = vmatprep.subr.mxu0 %v725
    %872 = vmatpush1.msra.mxu0 %v724
    %873 = vmatprep.subr.mxu0 %v727
    %874 = vmatpush1.msra.mxu0 %v726
    %875 = vmatprep.subr.mxu0 %v729
    %876 = vmatpush1.msra.mxu0 %v728
    %877 = vmatprep.subr.mxu0 %v731
    %878 = vmatpush1.msra.mxu0 %v730
    %879 = vmatprep.subr.mxu0 %v733
    %880 = vmatpush1.msra.mxu0 %v732
    %881 = vmatprep.subr.mxu0 %v735
    %882 = vmatpush1.msra.mxu0 %v734
    %883 = vmatprep.subr.mxu0 %v737
    %884 = vmatpush1.msra.mxu0 %v736
    %885 = vmatprep.subr.mxu0 %v739
    %886 = vmatpush1.msra.mxu0 %v738
    %887 = vmatprep.subr.mxu0 %v741
    %888 = vmatpush1.msra.mxu0 %v740
    %889 = vmatprep.subr.mxu0 %v743
    %890 = vmatpush1.msra.mxu0 %v742
    %891 = vmatprep.subr.mxu0 %v745
    %892 = vmatpush1.msra.mxu0 %v744
    %893 = vmatprep.subr.mxu0 %v747
    %894 = vmatpush1.msra.mxu0 %v746
    %895 = vmatprep.subr.mxu0 %v749
    %896 = vmatpush1.msra.mxu0 %v748
    %897 = vmatprep.subr.mxu0 %v751
    %898 = vmatpush1.msra.mxu0 %v750
    %899 = vmatprep.subr.mxu0 %v753
    %900 = vmatpush1.msra.mxu0 %v752
    %901 = vmatprep.subr.mxu0 %v755
    %902 = vmatpush1.msra.mxu0 %v754
    %903 = vmatprep.subr.mxu0 %v757
    %904 = vmatpush1.msra.mxu0 %v756
    %905 = vmatprep.subr.mxu0 %v759
    %906 = vmatpush1.msra.mxu0 %v758
    %907 = vmatprep.subr.mxu0 %v761
    %908 = vmatpush1.msra.mxu0 %v760
    %909 = vmatprep.subr.mxu0 %v763
    %910 = vmatpush1.msra.mxu0 %v762
    %911 = vmatprep.subr.mxu0 %v765
    %912 = vmatpush1.msra.mxu0 %v764
    %913 = vmatprep.mubr.f32.mxu0 %v637
    %914 = vmatmul.mubr.f32.gmra.mrb[0].mxu0 %v636
    %v915 = vpop.f32.mrb[0].mxu0
    %v916 = vadd.f32 %v845, %v915
    %v917 = vpop.f32.mrb[0].mxu0
    %v918 = vadd.f32 %v847, %v917
    %919 = vdwg.mxu0
    %v920 = vadd.f32 %v916, %v459
    %v921 = vadd.f32 %v918, %v463
    %v922 = vld [vmem:[#allocation10] sm:$0xff]
    %v923 = vld [vmem:[#allocation10 + $0x8] sm:$0xff]
    %v924 = vld [vmem:[#allocation10 + $0x10] sm:$0xff]
    %v925 = vld [vmem:[#allocation10 + $0x18] sm:$0xff]
    %v926 = vld [vmem:[#allocation10 + $0x20] sm:$0xff]
    %v927 = vld [vmem:[#allocation10 + $0x28] sm:$0xff]
    %v928 = vld [vmem:[#allocation10 + $0x30] sm:$0xff]
    %v929 = vld [vmem:[#allocation10 + $0x38] sm:$0xff]
    %v930 = vld [vmem:[#allocation10 + $0x40] sm:$0xff]
    %v931 = vld [vmem:[#allocation10 + $0x48] sm:$0xff]
    %v932 = vld [vmem:[#allocation10 + $0x50] sm:$0xff]
    %v933 = vld [vmem:[#allocation10 + $0x58] sm:$0xff]
    %v934 = vld [vmem:[#allocation10 + $0x60] sm:$0xff]
    %v935 = vld [vmem:[#allocation10 + $0x68] sm:$0xff]
    %v936 = vld [vmem:[#allocation10 + $0x70] sm:$0xff]
    %v937 = vld [vmem:[#allocation10 + $0x78] sm:$0xff]
    %v938 = vld [vmem:[#allocation10 + $0x80] sm:$0xff]
    %v939 = vld [vmem:[#allocation10 + $0x88] sm:$0xff]
    %v940 = vld [vmem:[#allocation10 + $0x90] sm:$0xff]
    %v941 = vld [vmem:[#allocation10 + $0x98] sm:$0xff]
    %v942 = vld [vmem:[#allocation10 + $0xa0] sm:$0xff]
    %v943 = vld [vmem:[#allocation10 + $0xa8] sm:$0xff]
    %v944 = vld [vmem:[#allocation10 + $0xb0] sm:$0xff]
    %v945 = vld [vmem:[#allocation10 + $0xb8] sm:$0xff]
    %v946 = vld [vmem:[#allocation10 + $0xc0] sm:$0xff]
    %v947 = vld [vmem:[#allocation10 + $0xc8] sm:$0xff]
    %v948 = vld [vmem:[#allocation10 + $0xd0] sm:$0xff]
    %v949 = vld [vmem:[#allocation10 + $0xd8] sm:$0xff]
    %v950 = vld [vmem:[#allocation10 + $0xe0] sm:$0xff]
    %v951 = vld [vmem:[#allocation10 + $0xe8] sm:$0xff]
    %v952 = vld [vmem:[#allocation10 + $0xf0] sm:$0xff]
    %v953 = vld [vmem:[#allocation10 + $0xf8] sm:$0xff]
    %v954 = vld [vmem:[#allocation10 + $0x100] sm:$0xff]
    %v955 = vld [vmem:[#allocation10 + $0x108] sm:$0xff]
    %v956 = vld [vmem:[#allocation10 + $0x110] sm:$0xff]
    %v957 = vld [vmem:[#allocation10 + $0x118] sm:$0xff]
    %v958 = vld [vmem:[#allocation10 + $0x120] sm:$0xff]
    %v959 = vld [vmem:[#allocation10 + $0x128] sm:$0xff]
    %v960 = vld [vmem:[#allocation10 + $0x130] sm:$0xff]
    %v961 = vld [vmem:[#allocation10 + $0x138] sm:$0xff]
    %v962 = vld [vmem:[#allocation10 + $0x140] sm:$0xff]
    %v963 = vld [vmem:[#allocation10 + $0x148] sm:$0xff]
    %v964 = vld [vmem:[#allocation10 + $0x150] sm:$0xff]
    %v965 = vld [vmem:[#allocation10 + $0x158] sm:$0xff]
    %v966 = vld [vmem:[#allocation10 + $0x160] sm:$0xff]
    %v967 = vld [vmem:[#allocation10 + $0x168] sm:$0xff]
    %v968 = vld [vmem:[#allocation10 + $0x170] sm:$0xff]
    %v969 = vld [vmem:[#allocation10 + $0x178] sm:$0xff]
    %v970 = vld [vmem:[#allocation10 + $0x180] sm:$0xff]
    %v971 = vld [vmem:[#allocation10 + $0x188] sm:$0xff]
    %v972 = vld [vmem:[#allocation10 + $0x190] sm:$0xff]
    %v973 = vld [vmem:[#allocation10 + $0x198] sm:$0xff]
    %v974 = vld [vmem:[#allocation10 + $0x1a0] sm:$0xff]
    %v975 = vld [vmem:[#allocation10 + $0x1a8] sm:$0xff]
    %v976 = vld [vmem:[#allocation10 + $0x1b0] sm:$0xff]
    %v977 = vld [vmem:[#allocation10 + $0x1b8] sm:$0xff]
    %v978 = vld [vmem:[#allocation10 + $0x1c0] sm:$0xff]
    %v979 = vld [vmem:[#allocation10 + $0x1c8] sm:$0xff]
    %v980 = vld [vmem:[#allocation10 + $0x1d0] sm:$0xff]
    %v981 = vld [vmem:[#allocation10 + $0x1d8] sm:$0xff]
    %v982 = vld [vmem:[#allocation10 + $0x1e0] sm:$0xff]
    %v983 = vld [vmem:[#allocation10 + $0x1e8] sm:$0xff]
    %v984 = vld [vmem:[#allocation10 + $0x1f0] sm:$0xff]
    %v985 = vld [vmem:[#allocation10 + $0x1f8] sm:$0xff]
    %v986 = vld [vmem:[#allocation11] sm:$0xff]
    %v987 = vld [vmem:[#allocation11 + $0x8] sm:$0xff]
    %v988 = vld [vmem:[#allocation11 + $0x10] sm:$0xff]
    %v989 = vld [vmem:[#allocation11 + $0x18] sm:$0xff]
    %v990 = vld [vmem:[#allocation11 + $0x20] sm:$0xff]
    %v991 = vld [vmem:[#allocation11 + $0x28] sm:$0xff]
    %v992 = vld [vmem:[#allocation11 + $0x30] sm:$0xff]
    %v993 = vld [vmem:[#allocation11 + $0x38] sm:$0xff]
    %v994 = vld [vmem:[#allocation11 + $0x40] sm:$0xff]
    %v995 = vld [vmem:[#allocation11 + $0x48] sm:$0xff]
    %v996 = vld [vmem:[#allocation11 + $0x50] sm:$0xff]
    %v997 = vld [vmem:[#allocation11 + $0x58] sm:$0xff]
    %v998 = vld [vmem:[#allocation11 + $0x60] sm:$0xff]
    %v999 = vld [vmem:[#allocation11 + $0x68] sm:$0xff]
    %v1000 = vld [vmem:[#allocation11 + $0x70] sm:$0xff]
    %v1001 = vld [vmem:[#allocation11 + $0x78] sm:$0xff]
    %v1002 = vld [vmem:[#allocation11 + $0x80] sm:$0xff]
    %v1003 = vld [vmem:[#allocation11 + $0x88] sm:$0xff]
    %v1004 = vld [vmem:[#allocation11 + $0x90] sm:$0xff]
    %v1005 = vld [vmem:[#allocation11 + $0x98] sm:$0xff]
    %v1006 = vld [vmem:[#allocation11 + $0xa0] sm:$0xff]
    %v1007 = vld [vmem:[#allocation11 + $0xa8] sm:$0xff]
    %v1008 = vld [vmem:[#allocation11 + $0xb0] sm:$0xff]
    %v1009 = vld [vmem:[#allocation11 + $0xb8] sm:$0xff]
    %v1010 = vld [vmem:[#allocation11 + $0xc0] sm:$0xff]
    %v1011 = vld [vmem:[#allocation11 + $0xc8] sm:$0xff]
    %v1012 = vld [vmem:[#allocation11 + $0xd0] sm:$0xff]
    %v1013 = vld [vmem:[#allocation11 + $0xd8] sm:$0xff]
    %v1014 = vld [vmem:[#allocation11 + $0xe0] sm:$0xff]
    %v1015 = vld [vmem:[#allocation11 + $0xe8] sm:$0xff]
    %v1016 = vld [vmem:[#allocation11 + $0xf0] sm:$0xff]
    %v1017 = vld [vmem:[#allocation11 + $0xf8] sm:$0xff]
    %1018 = vmatprep.subr.mxu0 %v987
    %1019 = vmatpush1.msra.mxu0 %v986
    %1020 = vmatprep.subr.mxu0 %v989
    %1021 = vmatpush1.msra.mxu0 %v988
    %1022 = vmatprep.subr.mxu0 %v991
    %1023 = vmatpush1.msra.mxu0 %v990
    %1024 = vmatprep.subr.mxu0 %v993
    %1025 = vmatpush1.msra.mxu0 %v992
    %1026 = vmatprep.subr.mxu0 %v995
    %1027 = vmatpush1.msra.mxu0 %v994
    %1028 = vmatprep.subr.mxu0 %v997
    %1029 = vmatpush1.msra.mxu0 %v996
    %1030 = vmatprep.subr.mxu0 %v999
    %1031 = vmatpush1.msra.mxu0 %v998
    %1032 = vmatprep.subr.mxu0 %v1001
    %1033 = vmatpush1.msra.mxu0 %v1000
    %1034 = vmatprep.subr.mxu0 %v1003
    %1035 = vmatpush1.msra.mxu0 %v1002
    %1036 = vmatprep.subr.mxu0 %v1005
    %1037 = vmatpush1.msra.mxu0 %v1004
    %1038 = vmatprep.subr.mxu0 %v1007
    %1039 = vmatpush1.msra.mxu0 %v1006
    %1040 = vmatprep.subr.mxu0 %v1009
    %1041 = vmatpush1.msra.mxu0 %v1008
    %1042 = vmatprep.subr.mxu0 %v1011
    %1043 = vmatpush1.msra.mxu0 %v1010
    %1044 = vmatprep.subr.mxu0 %v1013
    %1045 = vmatpush1.msra.mxu0 %v1012
    %1046 = vmatprep.subr.mxu0 %v1015
    %1047 = vmatpush1.msra.mxu0 %v1014
    %1048 = vmatprep.subr.mxu0 %v1017
    %1049 = vmatpush1.msra.mxu0 %v1016
    %1050 = vmatprep.subr.mxu0 0.0
    %1051 = vmatpush1.msra.mxu0 0.0
    %1052 = vmatprep.subr.mxu0 0.0
    %1053 = vmatpush1.msra.mxu0 0.0
    %1054 = vmatprep.subr.mxu0 0.0
    %1055 = vmatpush1.msra.mxu0 0.0
    %1056 = vmatprep.subr.mxu0 0.0
    %1057 = vmatpush1.msra.mxu0 0.0
    %1058 = vmatprep.subr.mxu0 0.0
    %1059 = vmatpush1.msra.mxu0 0.0
    %1060 = vmatprep.subr.mxu0 0.0
    %1061 = vmatpush1.msra.mxu0 0.0
    %1062 = vmatprep.subr.mxu0 0.0
    %1063 = vmatpush1.msra.mxu0 0.0
    %1064 = vmatprep.subr.mxu0 0.0
    %1065 = vmatpush1.msra.mxu0 0.0
    %1066 = vmatprep.subr.mxu0 0.0
    %1067 = vmatpush1.msra.mxu0 0.0
    %1068 = vmatprep.subr.mxu0 0.0
    %1069 = vmatpush1.msra.mxu0 0.0
    %1070 = vmatprep.subr.mxu0 0.0
    %1071 = vmatpush1.msra.mxu0 0.0
    %1072 = vmatprep.subr.mxu0 0.0
    %1073 = vmatpush1.msra.mxu0 0.0
    %1074 = vmatprep.subr.mxu0 0.0
    %1075 = vmatpush1.msra.mxu0 0.0
    %1076 = vmatprep.subr.mxu0 0.0
    %1077 = vmatpush1.msra.mxu0 0.0
    %1078 = vmatprep.subr.mxu0 0.0
    %1079 = vmatpush1.msra.mxu0 0.0
    %1080 = vmatprep.subr.mxu0 0.0
    %1081 = vmatpush1.msra.mxu0 0.0
    %1082 = vmatprep.mubr.f32.mxu0 0.0
    %1083 = vmatmul.mubr.f32.gmra.mrb[0].mxu0 %v120
    %v1084 = vpop.f32.mrb[0].mxu0
    %v1085 = vadd.f32 0.0, %v1084
    %v1086 = vpop.f32.mrb[0].mxu0
    %v1087 = vadd.f32 0.0, %v1086
    %1088 = vdwg.mxu0
    %1089 = vmatprep.subr.mxu0 %v923
    %1090 = vmatpush1.msra.mxu0 %v922
    %1091 = vmatprep.subr.mxu0 %v925
    %1092 = vmatpush1.msra.mxu0 %v924
    %1093 = vmatprep.subr.mxu0 %v927
    %1094 = vmatpush1.msra.mxu0 %v926
    %1095 = vmatprep.subr.mxu0 %v929
    %1096 = vmatpush1.msra.mxu0 %v928
    %1097 = vmatprep.subr.mxu0 %v931
    %1098 = vmatpush1.msra.mxu0 %v930
    %1099 = vmatprep.subr.mxu0 %v933
    %1100 = vmatpush1.msra.mxu0 %v932
    %1101 = vmatprep.subr.mxu0 %v935
    %1102 = vmatpush1.msra.mxu0 %v934
    %1103 = vmatprep.subr.mxu0 %v937
    %1104 = vmatpush1.msra.mxu0 %v936
    %1105 = vmatprep.subr.mxu0 %v939
    %1106 = vmatpush1.msra.mxu0 %v938
    %1107 = vmatprep.subr.mxu0 %v941
    %1108 = vmatpush1.msra.mxu0 %v940
    %1109 = vmatprep.subr.mxu0 %v943
    %1110 = vmatpush1.msra.mxu0 %v942
    %1111 = vmatprep.subr.mxu0 %v945
    %1112 = vmatpush1.msra.mxu0 %v944
    %1113 = vmatprep.subr.mxu0 %v947
    %1114 = vmatpush1.msra.mxu0 %v946
    %1115 = vmatprep.subr.mxu0 %v949
    %1116 = vmatpush1.msra.mxu0 %v948
    %1117 = vmatprep.subr.mxu0 %v951
    %1118 = vmatpush1.msra.mxu0 %v950
    %1119 = vmatprep.subr.mxu0 %v953
    %1120 = vmatpush1.msra.mxu0 %v952
    %1121 = vmatprep.subr.mxu0 %v955
    %1122 = vmatpush1.msra.mxu0 %v954
    %1123 = vmatprep.subr.mxu0 %v957
    %1124 = vmatpush1.msra.mxu0 %v956
    %1125 = vmatprep.subr.mxu0 %v959
    %1126 = vmatpush1.msra.mxu0 %v958
    %1127 = vmatprep.subr.mxu0 %v961
    %1128 = vmatpush1.msra.mxu0 %v960
    %1129 = vmatprep.subr.mxu0 %v963
    %1130 = vmatpush1.msra.mxu0 %v962
    %1131 = vmatprep.subr.mxu0 %v965
    %1132 = vmatpush1.msra.mxu0 %v964
    %1133 = vmatprep.subr.mxu0 %v967
    %1134 = vmatpush1.msra.mxu0 %v966
    %1135 = vmatprep.subr.mxu0 %v969
    %1136 = vmatpush1.msra.mxu0 %v968
    %1137 = vmatprep.subr.mxu0 %v971
    %1138 = vmatpush1.msra.mxu0 %v970
    %1139 = vmatprep.subr.mxu0 %v973
    %1140 = vmatpush1.msra.mxu0 %v972
    %1141 = vmatprep.subr.mxu0 %v975
    %1142 = vmatpush1.msra.mxu0 %v974
    %1143 = vmatprep.subr.mxu0 %v977
    %1144 = vmatpush1.msra.mxu0 %v976
    %1145 = vmatprep.subr.mxu0 %v979
    %1146 = vmatpush1.msra.mxu0 %v978
    %1147 = vmatprep.subr.mxu0 %v981
    %1148 = vmatpush1.msra.mxu0 %v980
    %1149 = vmatprep.subr.mxu0 %v983
    %1150 = vmatpush1.msra.mxu0 %v982
    %1151 = vmatprep.subr.mxu0 %v985
    %1152 = vmatpush1.msra.mxu0 %v984
    %1153 = vmatprep.mubr.f32.mxu0 %v463
    %1154 = vmatmul.mubr.f32.gmra.mrb[0].mxu0 %v459
    %v1155 = vpop.f32.mrb[0].mxu0
    %v1156 = vadd.f32 %v1085, %v1155
    %v1157 = vpop.f32.mrb[0].mxu0
    %v1158 = vadd.f32 %v1087, %v1157
    %1159 = vdwg.mxu0
    %v1160 = vld [vmem:[%s9] sm:$0x3]
    %v1162 = vlaneseq
    %v1163 = vshrl.u32 %v1162, 7
    %v1164 = vsub.s32 0, %v1163
    %v1165 = vrot.slane %v1160, %v1164
    %v1166 = vlaneseq
    %v1167 = vshrl.u32 %v1166, 7
    %v1168 = vsub.s32 1, %v1167
    %v1169 = vrot.slane %v1160, %v1168
    %v1172 = vadd.f32 %v1156, %v1165
    %v1173 = vadd.f32 %v1158, %v1169
    %vm1174 = vcmp.gt.f32.partialorder %v1172, 20.0
    %vm1175 = vcmp.gt.f32.partialorder %v1173, 20.0
    %v1176 = vmin.f32 %v1172, 20.0
    %v1177 = vmin.f32 %v1173, 20.0
    %v1178 = vmul.f32 %v1176, 1.442695
    %v1179 = vpow.pop %v1178
    %v1180 = vmul.f32 %v1177, 1.442695
    %v1181 = vpow.pop %v1180
    %v1182 = vadd.f32 %v1179, 1.0
    %v1183 = vlog2.pop %v1182
    %v1184 = vmul.f32 %v1183, 0.6931472
    %v1185 = vmul.f32 -0.5, %v1179
    %v1186 = vadd.f32 %v1185, 1.0
    %v1187 = vmul.f32 %v1186, %v1179
    %v1188 = vand.u32 2147483647, %v1179
    %vm1189 = vcmp.lt.f32.partialorder %v1188, 0.0004427343
    %v1190 = vsel %vm1189, %v1187, %v1184
    %v1191 = vadd.f32 %v1181, 1.0
    %v1192 = vlog2.pop %v1191
    %v1193 = vmul.f32 %v1192, 0.6931472
    %v1194 = vmul.f32 -0.5, %v1181
    %v1195 = vadd.f32 %v1194, 1.0
    %v1196 = vmul.f32 %v1195, %v1181
    %v1197 = vand.u32 2147483647, %v1181
    %vm1198 = vcmp.lt.f32.partialorder %v1197, 0.0004427343
    %v1199 = vsel %vm1198, %v1196, %v1193
    %v1200 = vsel %vm1174, %v1172, %v1190
    %v1201 = vsel %vm1175, %v1173, %v1199
    %v1204 = vcombine.low %v920, %v921
    %v1206 = vunpack.c.l.s4 1966171168
    %v1207 = vunpack.c.0.s8 %v1206
    %v1208 = vlaneseq
    %v1209 = vshrl.u32 %v1208, 7
    %v1210 = vsub.s32 %v1207, %v1209
    %v1211 = vrot.slane %v1204, %v1210
    %v1213 = vunpack.c.l.s4 1966171168
    %v1214 = vunpack.c.0.s8 %v1213
    %v1215 = vlaneseq
    %v1216 = vshrl.u32 %v1215, 7
    %v1217 = vsub.s32 %v1214, %v1216
    %v1218 = vrot.slane %v1211, %v1217
    %v1220 = vlaneseq
    %vm1221 = vcmp.ge.s32.totalorder %v1220, 0
    %vm1222 = vcmp.lt.s32.totalorder %v1220, 256
    %vm1223 = vmand %vm1221, %vm1222
    %1224 = vst.msk [vmem:[#allocation13] sm:$0x3] %vm1223, %v1218
    %v1227 = vcombine.low %v1200, %v1201
    %v1229 = vunpack.c.l.s4 1966171168
    %v1230 = vunpack.c.0.s8 %v1229
    %v1231 = vlaneseq
    %v1232 = vshrl.u32 %v1231, 7
    %v1233 = vsub.s32 %v1230, %v1232
    %v1234 = vrot.slane %v1227, %v1233
    %v1236 = vunpack.c.l.s4 1966171168
    %v1237 = vunpack.c.0.s8 %v1236
    %v1238 = vlaneseq
    %v1239 = vshrl.u32 %v1238, 7
    %v1240 = vsub.s32 %v1237, %v1239
    %v1241 = vrot.slane %v1234, %v1240
    %1243 = vst.msk [vmem:[#allocation14] sm:$0x3] %vm1223, %v1241
    // Predicated region
    $region66: #{tpu_custom_call.1} parent=1 // pred_check
      _
    $region67: #{tpu_custom_call.1} parent=1 // pred_check_branch
      %1245 = sbr.rel (0) target = $region69
    $region68: #{tpu_custom_call.1} parent=1 // pred_region
      %s1247 = ssub.s32 32, 32
      %1248 = vsyncadd [#allocation4], %s1247
      %s1250 = sshll.u32 [#allocation13], 4
      %s1251 = int_to_ptr.vmem [resolvable:$true] %s1250
      %1253 = dma.vmem_to_hbm [thread:$0]  %s1251, 32, %s10, [#allocation4]
    $region69: #{tpu_custom_call.1} parent=1 // pred_fallthru
      _
    // Predicated region
    $region70: #{tpu_custom_call.1} parent=1 // pred_check
      _
    $region71: #{tpu_custom_call.1} parent=1 // pred_check_branch
      %1255 = sbr.rel (0) target = $region73
    $region72: #{tpu_custom_call.1} parent=1 // pred_region
      %s1257 = ssub.s32 32, 32
      %1258 = vsyncadd [#allocation15], %s1257
      %s1260 = sshll.u32 [#allocation14], 4
      %s1261 = int_to_ptr.vmem [resolvable:$true] %s1260
      %1263 = dma.vmem_to_hbm [thread:$0]  %s1261, 32, %s11, [#allocation15]
    $region73: #{tpu_custom_call.1} parent=1 // pred_fallthru
      _
    // Predicated region
    $region74: #{tpu_custom_call.1} parent=1 // pred_check
      _
    $region75: #{tpu_custom_call.1} parent=1 // pred_check_branch
      %1265 = sbr.rel (0) target = $region77
    $region76: #{tpu_custom_call.1} parent=1 // pred_region
      %1266 = dma.done [#allocation4], 32
    $region77: #{tpu_custom_call.1} parent=1 // pred_fallthru
      _
    // Predicated region
    $region78: #{tpu_custom_call.1} parent=1 // pred_check
      _
    $region79: #{tpu_custom_call.1} parent=1 // pred_check_branch
      %1268 = sbr.rel (0) target = $region81
    $region80: #{tpu_custom_call.1} parent=1 // pred_region
      %1269 = dma.done [#allocation15], 32
    $region81: #{tpu_custom_call.1} parent=1 // pred_fallthru
      _
    %1270 = vsyncpa [#allocation3], 1
    %1271 = vsyncpa [#allocation6], 1
    %1272 = vsyncpa [#allocation9], 1
    %1273 = vsyncpa [#allocation12], 1
    %1274 = vsyncpa [#allocation4], 1
    %1275 = vsyncpa [#allocation15], 1

</llo_original>
